<compile_context>
chip_gen: v7x
topology: tpu7x:2x2x1
jax: 0.10.0
libtpu: 0.0.40
codegen_flags: <defaults>
</compile_context>

<pallas_src>
import functools

import jax
import jax.numpy as jnp
from jax.experimental import pallas as pl
from jax.experimental.pallas import tpu as pltpu

BN_EPS = 1e-5


def _round_up(x, m):
    return (x + m - 1) // m * m


# ---------------------------------------------------------------------------
# Kernel: one GCN layer,  out_rowtile = epilogue( (A_rowtile @ M) @ W )
#   grid = (rows of A  [parallel],  K reduction over A columns [arbitrary])
#   acc  = fp32 VMEM accumulator (tm, C_in) for the N^2-sized matmul A @ M
#   epilogue at k == last:  y = acc @ W ; y = y*scale + shift ; [relu] ; store
# ---------------------------------------------------------------------------
def _gcn_layer_kernel(a_ref, m_ref, w_ref, scale_ref, shift_ref, o_ref,
                      acc_ref, *, apply_relu):
    k = pl.program_id(1)

    @pl.when(k == 0)
    def _():
        acc_ref[...] = jnp.zeros_like(acc_ref)

    # (tm, tk) bf16 x (tk, C_in) bf16 -> fp32 accumulate (native MXU).
    acc_ref[...] += jnp.dot(a_ref[...], m_ref[...],
                            preferred_element_type=jnp.float32)

    @pl.when(k == pl.num_programs(1) - 1)
    def _():
        # Small (tm, C_in) @ (C_in, C_out) matmul, then folded bias+BN epilogue.
        y = jnp.dot(acc_ref[...], w_ref[...],
                    preferred_element_type=jnp.float32)
        y = y * scale_ref[...] + shift_ref[...]
        if apply_relu:
            y = jnp.maximum(y, 0.0)
        # TODO(synk): training-mode Dropout (stochastic mask via pltpu.prng_*)
        # not emitted; eval-mode (identity) semantics used.
        o_ref[...] = y.astype(o_ref.dtype)


def _gcn_layer(a_pad, m_pad, w_pad, scale_pad, shift_pad, *,
               tm, tk, apply_relu, out_dtype):
    n_pad = a_pad.shape[0]
    c_in = m_pad.shape[1]
    c_out = w_pad.shape[1]
    grid = (n_pad // tm, n_pad // tk)

    return pl.pallas_call(
        functools.partial(_gcn_layer_kernel, apply_relu=apply_relu),
        out_shape=jax.ShapeDtypeStruct((n_pad, c_out), out_dtype),
        grid_spec=pltpu.PrefetchScalarGridSpec(
            num_scalar_prefetch=0,
            grid=grid,
            in_specs=[
                pl.BlockSpec((tm, tk), lambda i, k: (i, k)),        # A row panel
                pl.BlockSpec((tk, c_in), lambda i, k: (k, 0)),      # node rows
                pl.BlockSpec((c_in, c_out), lambda i, k: (0, 0)),   # W (resident)
                pl.BlockSpec((1, c_out), lambda i, k: (0, 0)),      # scale
                pl.BlockSpec((1, c_out), lambda i, k: (0, 0)),      # shift
            ],
            out_specs=pl.BlockSpec((tm, c_out), lambda i, k: (i, 0)),
            scratch_shapes=[pltpu.VMEM((tm, c_in), jnp.float32)],
        ),
        compiler_params=pltpu.CompilerParams(
            dimension_semantics=("parallel", "arbitrary"),
            vmem_limit_bytes=32 * 1024 * 1024,   # safe on v5e/v6e/v7x; tiles use ~2 MiB
        ),
    )(a_pad, m_pad, w_pad, scale_pad, shift_pad)


# ---------------------------------------------------------------------------
# Glue (plain JAX): adjacency, BN folding, padding.
# ---------------------------------------------------------------------------
def gcn_normalized_adjacency(edge_index, num_nodes):
    """Dense GCN-normalized adjacency D^-1/2 (A + I) D^-1/2 (edges src->dst).

    Built with a one-hot matmul (MXU-friendly) instead of an XLA scatter.
    For repeated inference on the same graph, cache this result outside the hot loop.
    """
    src, dst = edge_index[0], edge_index[1]
    oh_dst = jax.nn.one_hot(dst, num_nodes, dtype=jnp.float32)   # (E, N)
    oh_src = jax.nn.one_hot(src, num_nodes, dtype=jnp.float32)   # (E, N)
    a = oh_dst.T @ oh_src                                        # counts (dups add, as in PyG)
    a = a + jnp.eye(num_nodes, dtype=jnp.float32)                # self loops
    deg = jnp.sum(a, axis=1)                                     # in-degree incl. self loop
    dinv = jnp.where(deg > 0, jax.lax.rsqrt(deg), 0.0)
    return dinv[:, None] * a * dinv[None, :]


def _fold_bias_bn(bias, gamma, beta, mean, var, apply_bn):
    """y = BN(x + bias)  ==  x * scale + shift  (eval mode, running stats)."""
    if apply_bn:
        scale = gamma * jax.lax.rsqrt(var + BN_EPS)
        shift = (bias - mean) * scale + beta
    else:
        scale = jnp.ones_like(bias)
        shift = bias
    return scale[None, :], shift[None, :]


def _pad2(a, rows, cols):
    return jnp.pad(a, ((0, rows - a.shape[0]), (0, cols - a.shape[1])))


def _choose_tiles(n):
    """Row/K tile sizes dividing the padded node count."""
    if n <= 256:
        n_pad = max(_round_up(n, 128), 128)
        return n_pad, n_pad, n_pad            # single block per axis
    n_pad = _round_up(n, 512)
    return n_pad, 256, 512                    # tm=256 (parallel rows), tk=512 (reduction)


def binlex_inner_gnn(x, edge_index, params):
    n, f = x.shape
    hidden = params["w1"].shape[1]
    out_dim = params["w2"].shape[1]

    a_norm = gcn_normalized_adjacency(edge_index, n)

    apply_bn = n > 1   # PyTorch module skips BatchNorm when a single node
    scale1, shift1 = _fold_bias_bn(params["b1"], params["bn1_gamma"], params["bn1_beta"],
                                   params["bn1_mean"], params["bn1_var"], apply_bn)
    scale2, shift2 = _fold_bias_bn(params["b2"], params["bn2_gamma"], params["bn2_beta"],
                                   params["bn2_mean"], params["bn2_var"], apply_bn)

    # Pad to lane-dense channel widths and tile-divisible node counts.
    n_pad, tm, tk = _choose_tiles(n)
    f_pad = _round_up(f, 128)
    h_pad = _round_up(hidden, 128)
    o_pad = _round_up(out_dim, 128)

    a_p = _pad2(a_norm, n_pad, n_pad).astype(jnp.bfloat16)
    x_p = _pad2(x, n_pad, f_pad).astype(jnp.bfloat16)
    w1_p = _pad2(params["w1"], f_pad, h_pad)
    w2_p = _pad2(params["w2"], h_pad, o_pad)
    s1_p, t1_p = _pad2(scale1, 1, h_pad), _pad2(shift1, 1, h_pad)
    s2_p, t2_p = _pad2(scale2, 1, o_pad), _pad2(shift2, 1, o_pad)

    # Layer 1: h = relu(BN1(A (X W1) + b1)); output in bf16 (feeds layer 2's MXU).
    h_p = _gcn_layer(a_p, x_p, w1_p, s1_p, t1_p,
                     tm=tm, tk=tk, apply_relu=True, out_dtype=jnp.bfloat16)
    # Layer 2: z = BN2(A (h W2) + b2)
    z_p = _gcn_layer(a_p, h_p, w2_p, s2_p, t2_p,
                     tm=tm, tk=tk, apply_relu=False, out_dtype=jnp.float32)

    return z_p[:n, :out_dim]


def init_params(key, node_features_dim, hidden_dim, output_dim):
    k1, k2 = jax.random.split(key, 2)
    scale1 = 1.0 / jnp.sqrt(node_features_dim)
    scale2 = 1.0 / jnp.sqrt(hidden_dim)
    return {
        # GCNConv weights stored as (in, out) so the math is X @ W.
        "w1": jax.random.uniform(k1, (node_features_dim, hidden_dim), jnp.float32,
                                 -scale1, scale1),
        "b1": jnp.zeros((hidden_dim,), jnp.float32),
        "bn1_gamma": jnp.ones((hidden_dim,), jnp.float32),
        "bn1_beta": jnp.zeros((hidden_dim,), jnp.float32),
        "bn1_mean": jnp.zeros((hidden_dim,), jnp.float32),
        "bn1_var": jnp.ones((hidden_dim,), jnp.float32),
        "w2": jax.random.uniform(k2, (hidden_dim, output_dim), jnp.float32,
                                 -scale2, scale2),
        "b2": jnp.zeros((output_dim,), jnp.float32),
        "bn2_gamma": jnp.ones((output_dim,), jnp.float32),
        "bn2_beta": jnp.zeros((output_dim,), jnp.float32),
        "bn2_mean": jnp.zeros((output_dim,), jnp.float32),
        "bn2_var": jnp.ones((output_dim,), jnp.float32),
    }


def _reference(x, edge_index, params):
    """Pure-JAX fp32 reference with the original module's eval-mode semantics."""
    n = x.shape[0]
    a = gcn_normalized_adjacency(edge_index, n)
    h = a @ (x @ params["w1"]) + params["b1"]
    if n > 1:
        h = ((h - params["bn1_mean"]) / jnp.sqrt(params["bn1_var"] + BN_EPS)
             * params["bn1_gamma"] + params["bn1_beta"])
    h = jnp.maximum(h, 0.0)
    z = a @ (h @ params["w2"]) + params["b2"]
    if n > 1:
        z = ((z - params["bn2_mean"]) / jnp.sqrt(params["bn2_var"] + BN_EPS)
             * params["bn2_gamma"] + params["bn2_beta"])
    return z


if __name__ == "__main__":
    node_features_dim, hidden_dim, output_dim = 16, 32, 16
    num_nodes, num_edges = 8, 12

    key = jax.random.PRNGKey(0)
    kx, ke, kp = jax.random.split(key, 3)

    x = jax.random.normal(kx, (num_nodes, node_features_dim), jnp.float32)
    edge_index = jax.random.randint(ke, (2, num_edges), 0, num_nodes, jnp.int32)
    params = init_params(kp, node_features_dim, hidden_dim, output_dim)

    out = jax.block_until_ready(jax.jit(binlex_inner_gnn)(x, edge_index, params))

    ref = _reference(x, edge_index, params)
    assert out.shape == (num_nodes, output_dim)
    # bf16 A / node matrices with fp32 accumulation -> loosen tolerance vs fp32 ref.
    assert jnp.allclose(out, ref, atol=2e-2, rtol=2e-2), "mismatch vs JAX reference"

    print("KERNEL_OK")
</pallas_src>

<mosaic_0001>
module attributes {stable_mosaic.version = 11 : i64} {
  func.func @_gcn_layer_kernel(%arg0: i32, %arg1: i32, %arg2: memref<128x128xbf16, #tpu.memory_space<vmem>>, %arg3: memref<128x128xbf16, #tpu.memory_space<vmem>>, %arg4: memref<128x128xf32, #tpu.memory_space<vmem>>, %arg5: memref<1x128xf32, #tpu.memory_space<vmem>>, %arg6: memref<1x128xf32, #tpu.memory_space<vmem>>, %arg7: memref<128x128xbf16, #tpu.memory_space<vmem>>, %arg8: memref<128x128xf32, #tpu.memory_space<vmem>>) attributes {dimension_semantics = [#tpu.dimension_semantics<parallel>, #tpu.dimension_semantics<arbitrary>], iteration_bounds = array<i64: 1, 1>, scalar_prefetch = 0 : i64, scratch_operands = 1 : i64, tpu.core_type = #tpu.core_type<tc>, window_params = [{transform_indices = @transform_0, window_bounds = array<i64: 128, 128>}, {transform_indices = @transform_1, window_bounds = array<i64: 128, 128>}, {pipeline_mode = #tpu.pipeline_mode<synchronous>, transform_indices = @transform_2, window_bounds = array<i64: 128, 128>}, {pipeline_mode = #tpu.pipeline_mode<synchronous>, transform_indices = @transform_3, window_bounds = array<i64: 1, 128>}, {pipeline_mode = #tpu.pipeline_mode<synchronous>, transform_indices = @transform_4, window_bounds = array<i64: 1, 128>}, {transform_indices = @transform_5, window_bounds = array<i64: 128, 128>}]} {
    %c0_i32 = arith.constant 0 : i32
    %0 = arith.cmpi eq, %arg1, %c0_i32 : i32
    %1 = arith.extui %0 : i1 to i32
    %c0_i32_0 = arith.constant 0 : i32
    %2 = arith.cmpi ne, %1, %c0_i32_0 : i32
    scf.if %2 {
      %cst_10 = arith.constant 0.000000e+00 : f32
      %12 = vector.broadcast %cst_10 : f32 to vector<128x128xf32>
      %c0_11 = arith.constant 0 : index
      %c0_12 = arith.constant 0 : index
      %13 = vector.load %arg8[%c0_11, %c0_12] : memref<128x128xf32, #tpu.memory_space<vmem>>, vector<128x128xf32>
      tpu.vector_store %arg8[%c0_11, %c0_12], %12 {strides = array<i32>} : memref<128x128xf32, #tpu.memory_space<vmem>>, vector<128x128xf32>,
    } else {
    }
    %c0 = arith.constant 0 : index
    %c0_1 = arith.constant 0 : index
    %3 = vector.load %arg8[%c0, %c0_1] : memref<128x128xf32, #tpu.memory_space<vmem>>, vector<128x128xf32>
    %c0_2 = arith.constant 0 : index
    %c0_3 = arith.constant 0 : index
    %4 = vector.load %arg2[%c0_2, %c0_3] : memref<128x128xbf16, #tpu.memory_space<vmem>>, vector<128x128xbf16>
    %c0_4 = arith.constant 0 : index
    %c0_5 = arith.constant 0 : index
    %5 = vector.load %arg3[%c0_4, %c0_5] : memref<128x128xbf16, #tpu.memory_space<vmem>>, vector<128x128xbf16>
    %cst = arith.constant dense<0.000000e+00> : vector<128x128xf32>
    %6 = tpu.matmul %4, %5, %cst {dimension_numbers = #tpu.dot_dimension_numbers<[1], [0], [0], [1], [0, 0, 1, 1], [], []>} : vector<128x128xbf16>, vector<128x128xbf16>, vector<128x128xf32> -> vector<128x128xf32>
    %7 = arith.addf %3, %6 : vector<128x128xf32>
    %c0_6 = arith.constant 0 : index
    %c0_7 = arith.constant 0 : index
    %8 = vector.load %arg8[%c0_6, %c0_7] : memref<128x128xf32, #tpu.memory_space<vmem>>, vector<128x128xf32>
    tpu.vector_store %arg8[%c0_6, %c0_7], %7 {strides = array<i32>} : memref<128x128xf32, #tpu.memory_space<vmem>>, vector<128x128xf32>,
    %c0_i32_8 = arith.constant 0 : i32
    %9 = arith.cmpi eq, %arg1, %c0_i32_8 : i32
    %10 = arith.extui %9 : i1 to i32
    %c0_i32_9 = arith.constant 0 : i32
    %11 = arith.cmpi ne, %10, %c0_i32_9 : i32
    scf.if %11 {
      %c0_10 = arith.constant 0 : index
      %c0_11 = arith.constant 0 : index
      %12 = vector.load %arg8[%c0_10, %c0_11] : memref<128x128xf32, #tpu.memory_space<vmem>>, vector<128x128xf32>
      %c0_12 = arith.constant 0 : index
      %c0_13 = arith.constant 0 : index
      %13 = vector.load %arg4[%c0_12, %c0_13] : memref<128x128xf32, #tpu.memory_space<vmem>>, vector<128x128xf32>
      %cst_14 = arith.constant dense<0.000000e+00> : vector<128x128xf32>
      %14 = tpu.matmul %12, %13, %cst_14 {dimension_numbers = #tpu.dot_dimension_numbers<[1], [0], [0], [1], [0, 0, 1, 1], [], []>} : vector<128x128xf32>, vector<128x128xf32>, vector<128x128xf32> -> vector<128x128xf32>
      %c0_15 = arith.constant 0 : index
      %c0_16 = arith.constant 0 : index
      %15 = vector.load %arg5[%c0_15, %c0_16] : memref<1x128xf32, #tpu.memory_space<vmem>>, vector<1x128xf32>
      %16 = vector.broadcast %15 : vector<1x128xf32> to vector<128x128xf32>
      %17 = arith.mulf %14, %16 : vector<128x128xf32>
      %c0_17 = arith.constant 0 : index
      %c0_18 = arith.constant 0 : index
      %18 = vector.load %arg6[%c0_17, %c0_18] : memref<1x128xf32, #tpu.memory_space<vmem>>, vector<1x128xf32>
      %19 = vector.broadcast %18 : vector<1x128xf32> to vector<128x128xf32>
      %20 = arith.addf %17, %19 : vector<128x128xf32>
      %cst_19 = arith.constant 0.000000e+00 : f32
      %21 = vector.broadcast %cst_19 : f32 to vector<128x128xf32>
      %22 = arith.maximumf %20, %21 : vector<128x128xf32>
      %23 = arith.truncf %22 : vector<128x128xf32> to vector<128x128xbf16>
      %c0_20 = arith.constant 0 : index
      %c0_21 = arith.constant 0 : index
      %24 = vector.load %arg7[%c0_20, %c0_21] : memref<128x128xbf16, #tpu.memory_space<vmem>>, vector<128x128xbf16>
      tpu.vector_store %arg7[%c0_20, %c0_21], %23 {strides = array<i32>} : memref<128x128xbf16, #tpu.memory_space<vmem>>, vector<128x128xbf16>,
    } else {
    }
    return
  }
  func.func @transform_0(%arg0: i32, %arg1: i32) -> (i32, i32) {
    %c0_i32 = arith.constant 0 : i32
    return %arg0, %arg1 : i32, i32
  }
  func.func @transform_1(%arg0: i32, %arg1: i32) -> (i32, i32) {
    %c0_i32 = arith.constant 0 : i32
    %c0_i32_0 = arith.constant 0 : i32
    return %arg1, %c0_i32 : i32, i32
  }
  func.func @transform_2(%arg0: i32, %arg1: i32) -> (i32, i32) {
    %c0_i32 = arith.constant 0 : i32
    %c0_i32_0 = arith.constant 0 : i32
    %c0_i32_1 = arith.constant 0 : i32
    return %c0_i32, %c0_i32_0 : i32, i32
  }
  func.func @transform_3(%arg0: i32, %arg1: i32) -> (i32, i32) {
    %c0_i32 = arith.constant 0 : i32
    %c0_i32_0 = arith.constant 0 : i32
    %c0_i32_1 = arith.constant 0 : i32
    return %c0_i32, %c0_i32_0 : i32, i32
  }
  func.func @transform_4(%arg0: i32, %arg1: i32) -> (i32, i32) {
    %c0_i32 = arith.constant 0 : i32
    %c0_i32_0 = arith.constant 0 : i32
    %c0_i32_1 = arith.constant 0 : i32
    return %c0_i32, %c0_i32_0 : i32, i32
  }
  func.func @transform_5(%arg0: i32, %arg1: i32) -> (i32, i32) {
    %c0_i32 = arith.constant 0 : i32
    %c0_i32_0 = arith.constant 0 : i32
    return %arg0, %c0_i32 : i32, i32
  }
}

module attributes {stable_mosaic.version = 11 : i64} {
  func.func @_gcn_layer_kernel(%arg0: i32, %arg1: i32, %arg2: memref<128x128xbf16, #tpu.memory_space<vmem>>, %arg3: memref<128x128xbf16, #tpu.memory_space<vmem>>, %arg4: memref<128x128xf32, #tpu.memory_space<vmem>>, %arg5: memref<1x128xf32, #tpu.memory_space<vmem>>, %arg6: memref<1x128xf32, #tpu.memory_space<vmem>>, %arg7: memref<128x128xf32, #tpu.memory_space<vmem>>, %arg8: memref<128x128xf32, #tpu.memory_space<vmem>>) attributes {dimension_semantics = [#tpu.dimension_semantics<parallel>, #tpu.dimension_semantics<arbitrary>], iteration_bounds = array<i64: 1, 1>, scalar_prefetch = 0 : i64, scratch_operands = 1 : i64, tpu.core_type = #tpu.core_type<tc>, window_params = [{transform_indices = @transform_0, window_bounds = array<i64: 128, 128>}, {transform_indices = @transform_1, window_bounds = array<i64: 128, 128>}, {pipeline_mode = #tpu.pipeline_mode<synchronous>, transform_indices = @transform_2, window_bounds = array<i64: 128, 128>}, {pipeline_mode = #tpu.pipeline_mode<synchronous>, transform_indices = @transform_3, window_bounds = array<i64: 1, 128>}, {pipeline_mode = #tpu.pipeline_mode<synchronous>, transform_indices = @transform_4, window_bounds = array<i64: 1, 128>}, {transform_indices = @transform_5, window_bounds = array<i64: 128, 128>}]} {
    %c0_i32 = arith.constant 0 : i32
    %0 = arith.cmpi eq, %arg1, %c0_i32 : i32
    %1 = arith.extui %0 : i1 to i32
    %c0_i32_0 = arith.constant 0 : i32
    %2 = arith.cmpi ne, %1, %c0_i32_0 : i32
    scf.if %2 {
      %cst_10 = arith.constant 0.000000e+00 : f32
      %12 = vector.broadcast %cst_10 : f32 to vector<128x128xf32>
      %c0_11 = arith.constant 0 : index
      %c0_12 = arith.constant 0 : index
      %13 = vector.load %arg8[%c0_11, %c0_12] : memref<128x128xf32, #tpu.memory_space<vmem>>, vector<128x128xf32>
      tpu.vector_store %arg8[%c0_11, %c0_12], %12 {strides = array<i32>} : memref<128x128xf32, #tpu.memory_space<vmem>>, vector<128x128xf32>,
    } else {
    }
    %c0 = arith.constant 0 : index
    %c0_1 = arith.constant 0 : index
    %3 = vector.load %arg8[%c0, %c0_1] : memref<128x128xf32, #tpu.memory_space<vmem>>, vector<128x128xf32>
    %c0_2 = arith.constant 0 : index
    %c0_3 = arith.constant 0 : index
    %4 = vector.load %arg2[%c0_2, %c0_3] : memref<128x128xbf16, #tpu.memory_space<vmem>>, vector<128x128xbf16>
    %c0_4 = arith.constant 0 : index
    %c0_5 = arith.constant 0 : index
    %5 = vector.load %arg3[%c0_4, %c0_5] : memref<128x128xbf16, #tpu.memory_space<vmem>>, vector<128x128xbf16>
    %cst = arith.constant dense<0.000000e+00> : vector<128x128xf32>
    %6 = tpu.matmul %4, %5, %cst {dimension_numbers = #tpu.dot_dimension_numbers<[1], [0], [0], [1], [0, 0, 1, 1], [], []>} : vector<128x128xbf16>, vector<128x128xbf16>, vector<128x128xf32> -> vector<128x128xf32>
    %7 = arith.addf %3, %6 : vector<128x128xf32>
    %c0_6 = arith.constant 0 : index
    %c0_7 = arith.constant 0 : index
    %8 = vector.load %arg8[%c0_6, %c0_7] : memref<128x128xf32, #tpu.memory_space<vmem>>, vector<128x128xf32>
    tpu.vector_store %arg8[%c0_6, %c0_7], %7 {strides = array<i32>} : memref<128x128xf32, #tpu.memory_space<vmem>>, vector<128x128xf32>,
    %c0_i32_8 = arith.constant 0 : i32
    %9 = arith.cmpi eq, %arg1, %c0_i32_8 : i32
    %10 = arith.extui %9 : i1 to i32
    %c0_i32_9 = arith.constant 0 : i32
    %11 = arith.cmpi ne, %10, %c0_i32_9 : i32
    scf.if %11 {
      %c0_10 = arith.constant 0 : index
      %c0_11 = arith.constant 0 : index
      %12 = vector.load %arg8[%c0_10, %c0_11] : memref<128x128xf32, #tpu.memory_space<vmem>>, vector<128x128xf32>
      %c0_12 = arith.constant 0 : index
      %c0_13 = arith.constant 0 : index
      %13 = vector.load %arg4[%c0_12, %c0_13] : memref<128x128xf32, #tpu.memory_space<vmem>>, vector<128x128xf32>
      %cst_14 = arith.constant dense<0.000000e+00> : vector<128x128xf32>
      %14 = tpu.matmul %12, %13, %cst_14 {dimension_numbers = #tpu.dot_dimension_numbers<[1], [0], [0], [1], [0, 0, 1, 1], [], []>} : vector<128x128xf32>, vector<128x128xf32>, vector<128x128xf32> -> vector<128x128xf32>
      %c0_15 = arith.constant 0 : index
      %c0_16 = arith.constant 0 : index
      %15 = vector.load %arg5[%c0_15, %c0_16] : memref<1x128xf32, #tpu.memory_space<vmem>>, vector<1x128xf32>
      %16 = vector.broadcast %15 : vector<1x128xf32> to vector<128x128xf32>
      %17 = arith.mulf %14, %16 : vector<128x128xf32>
      %c0_17 = arith.constant 0 : index
      %c0_18 = arith.constant 0 : index
      %18 = vector.load %arg6[%c0_17, %c0_18] : memref<1x128xf32, #tpu.memory_space<vmem>>, vector<1x128xf32>
      %19 = vector.broadcast %18 : vector<1x128xf32> to vector<128x128xf32>
      %20 = arith.addf %17, %19 : vector<128x128xf32>
      %c0_19 = arith.constant 0 : index
      %c0_20 = arith.constant 0 : index
      %21 = vector.load %arg7[%c0_19, %c0_20] : memref<128x128xf32, #tpu.memory_space<vmem>>, vector<128x128xf32>
      tpu.vector_store %arg7[%c0_19, %c0_20], %20 {strides = array<i32>} : memref<128x128xf32, #tpu.memory_space<vmem>>, vector<128x128xf32>,
    } else {
    }
    return
  }
  func.func @transform_0(%arg0: i32, %arg1: i32) -> (i32, i32) {
    %c0_i32 = arith.constant 0 : i32
    return %arg0, %arg1 : i32, i32
  }
  func.func @transform_1(%arg0: i32, %arg1: i32) -> (i32, i32) {
    %c0_i32 = arith.constant 0 : i32
    %c0_i32_0 = arith.constant 0 : i32
    return %arg1, %c0_i32 : i32, i32
  }
  func.func @transform_2(%arg0: i32, %arg1: i32) -> (i32, i32) {
    %c0_i32 = arith.constant 0 : i32
    %c0_i32_0 = arith.constant 0 : i32
    %c0_i32_1 = arith.constant 0 : i32
    return %c0_i32, %c0_i32_0 : i32, i32
  }
  func.func @transform_3(%arg0: i32, %arg1: i32) -> (i32, i32) {
    %c0_i32 = arith.constant 0 : i32
    %c0_i32_0 = arith.constant 0 : i32
    %c0_i32_1 = arith.constant 0 : i32
    return %c0_i32, %c0_i32_0 : i32, i32
  }
  func.func @transform_4(%arg0: i32, %arg1: i32) -> (i32, i32) {
    %c0_i32 = arith.constant 0 : i32
    %c0_i32_0 = arith.constant 0 : i32
    %c0_i32_1 = arith.constant 0 : i32
    return %c0_i32, %c0_i32_0 : i32, i32
  }
  func.func @transform_5(%arg0: i32, %arg1: i32) -> (i32, i32) {
    %c0_i32 = arith.constant 0 : i32
    %c0_i32_0 = arith.constant 0 : i32
    return %arg0, %c0_i32 : i32, i32
  }
}

</mosaic_0001>

<llo_original>
// kernel: binlex_inner_gnn.3
$region0: #{binlex_inner_gnn.3}
  #allocation0 [shape = 'u32[]', space=smem, size = 0x4, offset = 0x4, fixed_abs, tag = 'smem constant byte address 0x4 - core index']
  #allocation1 [shape = 'u32[144,128]{1,0:T(1,128)}', space=vmem, size = 0x12000, scoped, tag = 'internal scratch']
  #allocation2 [shape = 'f32[128,128]{1,0:T(8,128)}', space=vmem, size = 0x10000, scoped, tag = 'scratch operand']
  %s0 = inlined_call_operand.vmem [shape: bf16[128,128], index: 0, kind: input, shape index: {}]
  %s1 = inlined_call_operand.vmem [shape: bf16[128,128], index: 1, kind: input, shape index: {}]
  %s2 = inlined_call_operand.vmem [shape: f32[128,128], index: 2, kind: input, shape index: {}]
  %s3 = inlined_call_operand.vmem [shape: f32[1,128], index: 3, kind: input, shape index: {}]
  %s4 = inlined_call_operand.vmem [shape: f32[1,128], index: 4, kind: input, shape index: {}]
  %s5 = inlined_call_operand.vmem [shape: f32[128,128], index: 5, kind: output, shape index: {}]
  %s6 = sld [smem:[#allocation0]]
  $region38: #{binlex_inner_gnn.3} parent=0
    _
  %s8 = ssub.s32 1, %s6
  %s9 = scalar_select 0, %s8, %s6
  // Predicated region
  $region2: #{binlex_inner_gnn.3} parent=0 // pred_check
    _
  $region3: #{binlex_inner_gnn.3} parent=0 // pred_check_branch
    %11 = sbr.rel (0) target = $region5
  $region4: #{binlex_inner_gnn.3} parent=0 // pred_region
    _
  $region5: #{binlex_inner_gnn.3} parent=0 // pred_fallthru
    _
  // Predicated region
  $region6: #{binlex_inner_gnn.3} parent=0 // pred_check
    _
  $region7: #{binlex_inner_gnn.3} parent=0 // pred_check_branch
    %13 = sbr.rel (0) target = $region9
  $region8: #{binlex_inner_gnn.3} parent=0 // pred_region
    _
  $region9: #{binlex_inner_gnn.3} parent=0 // pred_fallthru
    _
  // Predicated region
  $region10: #{binlex_inner_gnn.3} parent=0 // pred_check
    _
  $region11: #{binlex_inner_gnn.3} parent=0 // pred_check_branch
    %15 = sbr.rel (0) target = $region13
  $region12: #{binlex_inner_gnn.3} parent=0 // pred_region
    _
  $region13: #{binlex_inner_gnn.3} parent=0 // pred_fallthru
    _
  // Predicated region
  $region14: #{binlex_inner_gnn.3} parent=0 // pred_check
    _
  $region15: #{binlex_inner_gnn.3} parent=0 // pred_check_branch
    %17 = sbr.rel (0) target = $region17
  $region16: #{binlex_inner_gnn.3} parent=0 // pred_region
    _
  $region17: #{binlex_inner_gnn.3} parent=0 // pred_fallthru
    _
  // Predicated region
  $region18: #{binlex_inner_gnn.3} parent=0 // pred_check
    _
  $region19: #{binlex_inner_gnn.3} parent=0 // pred_check_branch
    %19 = sbr.rel (0) target = $region21
  $region20: #{binlex_inner_gnn.3} parent=0 // pred_region
    _
  $region21: #{binlex_inner_gnn.3} parent=0 // pred_fallthru
    _
  %p21 = scmp.eq.s32.totalorder 0, 0
  // Predicated region
  $region22: #{binlex_inner_gnn.3} parent=0 // pred_check
    %p22 = pneg %p21
  $region23: #{binlex_inner_gnn.3} parent=0 // pred_check_branch
    %24 = sbr.rel (%p22) target = $region25
  $region24: #{binlex_inner_gnn.3} parent=0 // pred_region
    %25 = vst [vmem:[#allocation2] sm:$0xff] 0.0
    %26 = vst [vmem:[#allocation2 + $0x8] sm:$0xff] 0.0
    %27 = vst [vmem:[#allocation2 + $0x10] sm:$0xff] 0.0
    %28 = vst [vmem:[#allocation2 + $0x18] sm:$0xff] 0.0
    %29 = vst [vmem:[#allocation2 + $0x20] sm:$0xff] 0.0
    %30 = vst [vmem:[#allocation2 + $0x28] sm:$0xff] 0.0
    %31 = vst [vmem:[#allocation2 + $0x30] sm:$0xff] 0.0
    %32 = vst [vmem:[#allocation2 + $0x38] sm:$0xff] 0.0
    %33 = vst [vmem:[#allocation2 + $0x40] sm:$0xff] 0.0
    %34 = vst [vmem:[#allocation2 + $0x48] sm:$0xff] 0.0
    %35 = vst [vmem:[#allocation2 + $0x50] sm:$0xff] 0.0
    %36 = vst [vmem:[#allocation2 + $0x58] sm:$0xff] 0.0
    %37 = vst [vmem:[#allocation2 + $0x60] sm:$0xff] 0.0
    %38 = vst [vmem:[#allocation2 + $0x68] sm:$0xff] 0.0
    %39 = vst [vmem:[#allocation2 + $0x70] sm:$0xff] 0.0
    %40 = vst [vmem:[#allocation2 + $0x78] sm:$0xff] 0.0
  $region25: #{binlex_inner_gnn.3} parent=0 // pred_fallthru
    _
  %v41 = vld [vmem:[#allocation2] sm:$0xff]
  %v42 = vld [vmem:[#allocation2 + $0x8] sm:$0xff]
  %v43 = vld [vmem:[#allocation2 + $0x10] sm:$0xff]
  %v44 = vld [vmem:[#allocation2 + $0x18] sm:$0xff]
  %v45 = vld [vmem:[#allocation2 + $0x20] sm:$0xff]
  %v46 = vld [vmem:[#allocation2 + $0x28] sm:$0xff]
  %v47 = vld [vmem:[#allocation2 + $0x30] sm:$0xff]
  %v48 = vld [vmem:[#allocation2 + $0x38] sm:$0xff]
  %v49 = vld [vmem:[#allocation2 + $0x40] sm:$0xff]
  %v50 = vld [vmem:[#allocation2 + $0x48] sm:$0xff]
  %v51 = vld [vmem:[#allocation2 + $0x50] sm:$0xff]
  %v52 = vld [vmem:[#allocation2 + $0x58] sm:$0xff]
  %v53 = vld [vmem:[#allocation2 + $0x60] sm:$0xff]
  %v54 = vld [vmem:[#allocation2 + $0x68] sm:$0xff]
  %v55 = vld [vmem:[#allocation2 + $0x70] sm:$0xff]
  %v56 = vld [vmem:[#allocation2 + $0x78] sm:$0xff]
  %v57 = vld [vmem:[%s0] sm:$0xf]
  %v58 = vld [vmem:[%s0 + $0x4] sm:$0xf]
  %v59 = vld [vmem:[%s0 + $0x8] sm:$0xf]
  %v60 = vld [vmem:[%s0 + $0xc] sm:$0xf]
  %v61 = vld [vmem:[%s0 + $0x10] sm:$0xf]
  %v62 = vld [vmem:[%s0 + $0x14] sm:$0xf]
  %v63 = vld [vmem:[%s0 + $0x18] sm:$0xf]
  %v64 = vld [vmem:[%s0 + $0x1c] sm:$0xf]
  %v65 = vld [vmem:[%s0 + $0x20] sm:$0xf]
  %v66 = vld [vmem:[%s0 + $0x24] sm:$0xf]
  %v67 = vld [vmem:[%s0 + $0x28] sm:$0xf]
  %v68 = vld [vmem:[%s0 + $0x2c] sm:$0xf]
  %v69 = vld [vmem:[%s0 + $0x30] sm:$0xf]
  %v70 = vld [vmem:[%s0 + $0x34] sm:$0xf]
  %v71 = vld [vmem:[%s0 + $0x38] sm:$0xf]
  %v72 = vld [vmem:[%s0 + $0x3c] sm:$0xf]
  %v73 = vld [vmem:[%s1] sm:$0xf]
  %v74 = vld [vmem:[%s1 + $0x4] sm:$0xf]
  %v75 = vld [vmem:[%s1 + $0x8] sm:$0xf]
  %v76 = vld [vmem:[%s1 + $0xc] sm:$0xf]
  %v77 = vld [vmem:[%s1 + $0x10] sm:$0xf]
  %v78 = vld [vmem:[%s1 + $0x14] sm:$0xf]
  %v79 = vld [vmem:[%s1 + $0x18] sm:$0xf]
  %v80 = vld [vmem:[%s1 + $0x1c] sm:$0xf]
  %v81 = vld [vmem:[%s1 + $0x20] sm:$0xf]
  %v82 = vld [vmem:[%s1 + $0x24] sm:$0xf]
  %v83 = vld [vmem:[%s1 + $0x28] sm:$0xf]
  %v84 = vld [vmem:[%s1 + $0x2c] sm:$0xf]
  %v85 = vld [vmem:[%s1 + $0x30] sm:$0xf]
  %v86 = vld [vmem:[%s1 + $0x34] sm:$0xf]
  %v87 = vld [vmem:[%s1 + $0x38] sm:$0xf]
  %v88 = vld [vmem:[%s1 + $0x3c] sm:$0xf]
  %v105 = vunpack.c.l.b16 %v57
  %v106 = vunpack.c.l.b16 %v58
  %v107 = vunpack.c.l.b16 %v59
  %v108 = vunpack.c.l.b16 %v60
  %v109 = vunpack.c.l.b16 %v61
  %v110 = vunpack.c.l.b16 %v62
  %v111 = vunpack.c.l.b16 %v63
  %v112 = vunpack.c.l.b16 %v64
  %v113 = vunpack.c.l.b16 %v65
  %v114 = vunpack.c.l.b16 %v66
  %v115 = vunpack.c.l.b16 %v67
  %v116 = vunpack.c.l.b16 %v68
  %v117 = vunpack.c.l.b16 %v69
  %v118 = vunpack.c.l.b16 %v70
  %v119 = vunpack.c.l.b16 %v71
  %v120 = vunpack.c.l.b16 %v72
  %v121 = vpack.c.b16 %v106, %v105
  %v122 = vpack.c.b16 %v108, %v107
  %v123 = vpack.c.b16 %v110, %v109
  %v124 = vpack.c.b16 %v112, %v111
  %v125 = vpack.c.b16 %v114, %v113
  %v126 = vpack.c.b16 %v116, %v115
  %v127 = vpack.c.b16 %v118, %v117
  %v128 = vpack.c.b16 %v120, %v119
  %v153 = vunpack.c.l.b16 %v73
  %v154 = vunpack.c.l.b16 %v74
  %v155 = vunpack.c.l.b16 %v75
  %v156 = vunpack.c.l.b16 %v76
  %v157 = vunpack.c.l.b16 %v77
  %v158 = vunpack.c.l.b16 %v78
  %v159 = vunpack.c.l.b16 %v79
  %v160 = vunpack.c.l.b16 %v80
  %v161 = vunpack.c.l.b16 %v81
  %v162 = vunpack.c.l.b16 %v82
  %v163 = vunpack.c.l.b16 %v83
  %v164 = vunpack.c.l.b16 %v84
  %v165 = vunpack.c.l.b16 %v85
  %v166 = vunpack.c.l.b16 %v86
  %v167 = vunpack.c.l.b16 %v87
  %v168 = vunpack.c.l.b16 %v88
  %v169 = vpack.c.b16 %v154, %v153
  %v170 = vpack.c.b16 %v156, %v155
  %v171 = vpack.c.b16 %v158, %v157
  %v172 = vpack.c.b16 %v160, %v159
  %v173 = vpack.c.b16 %v162, %v161
  %v174 = vpack.c.b16 %v164, %v163
  %v175 = vpack.c.b16 %v166, %v165
  %v176 = vpack.c.b16 %v168, %v167
  %185 = vmatprep.subr.bf16.mxu0 0
  %186 = vmatpush1.bf16.msra.mxu0 %v169
  %187 = vmatprep.subr.bf16.mxu0 0
  %188 = vmatpush1.bf16.msra.mxu0 %v170
  %189 = vmatprep.subr.bf16.mxu0 0
  %190 = vmatpush1.bf16.msra.mxu0 %v171
  %191 = vmatprep.subr.bf16.mxu0 0
  %192 = vmatpush1.bf16.msra.mxu0 %v172
  %193 = vmatprep.subr.bf16.mxu0 0
  %194 = vmatpush1.bf16.msra.mxu0 %v173
  %195 = vmatprep.subr.bf16.mxu0 0
  %196 = vmatpush1.bf16.msra.mxu0 %v174
  %197 = vmatprep.subr.bf16.mxu0 0
  %198 = vmatpush1.bf16.msra.mxu0 %v175
  %199 = vmatprep.subr.bf16.mxu0 0
  %200 = vmatpush1.bf16.msra.mxu0 %v176
  %201 = vmatprep.subr.bf16.mxu0 0
  %202 = vmatpush1.bf16.msra.mxu0 0
  %203 = vmatprep.subr.bf16.mxu0 0
  %204 = vmatpush1.bf16.msra.mxu0 0
  %205 = vmatprep.subr.bf16.mxu0 0
  %206 = vmatpush1.bf16.msra.mxu0 0
  %207 = vmatprep.subr.bf16.mxu0 0
  %208 = vmatpush1.bf16.msra.mxu0 0
  %209 = vmatprep.subr.bf16.mxu0 0
  %210 = vmatpush1.bf16.msra.mxu0 0
  %211 = vmatprep.subr.bf16.mxu0 0
  %212 = vmatpush1.bf16.msra.mxu0 0
  %213 = vmatprep.subr.bf16.mxu0 0
  %214 = vmatpush1.bf16.msra.mxu0 0
  %215 = vmatprep.subr.bf16.mxu0 0
  %216 = vmatpush1.bf16.msra.mxu0 0
  %217 = vmatprep.mubr.bf16.mxu0 0
  %218 = vmatmul.mubr.bf16.gmra.mrb[0].mxu0 %v121
  %v219 = vpop.f32.mrb[0].mxu0
  %v220 = vadd.f32 0.0, %v219
  %v221 = vpop.f32.mrb[0].mxu0
  %v222 = vpop.f32.mrb[0].mxu0
  %v223 = vadd.f32 0.0, %v222
  %v224 = vpop.f32.mrb[0].mxu0
  %225 = vmatprep.mubr.bf16.mxu0 0
  %226 = vmatmul.mubr.bf16.gmra.mrb[0].mxu0 %v122
  %v227 = vpop.f32.mrb[0].mxu0
  %v228 = vadd.f32 0.0, %v227
  %v229 = vpop.f32.mrb[0].mxu0
  %v230 = vpop.f32.mrb[0].mxu0
  %v231 = vadd.f32 0.0, %v230
  %v232 = vpop.f32.mrb[0].mxu0
  %233 = vmatprep.mubr.bf16.mxu0 0
  %234 = vmatmul.mubr.bf16.gmra.mrb[0].mxu0 %v123
  %v235 = vpop.f32.mrb[0].mxu0
  %v236 = vadd.f32 0.0, %v235
  %v237 = vpop.f32.mrb[0].mxu0
  %v238 = vpop.f32.mrb[0].mxu0
  %v239 = vadd.f32 0.0, %v238
  %v240 = vpop.f32.mrb[0].mxu0
  %241 = vmatprep.mubr.bf16.mxu0 0
  %242 = vmatmul.mubr.bf16.gmra.mrb[0].mxu0 %v124
  %v243 = vpop.f32.mrb[0].mxu0
  %v244 = vadd.f32 0.0, %v243
  %v245 = vpop.f32.mrb[0].mxu0
  %v246 = vpop.f32.mrb[0].mxu0
  %v247 = vadd.f32 0.0, %v246
  %v248 = vpop.f32.mrb[0].mxu0
  %249 = vmatprep.mubr.bf16.mxu0 0
  %250 = vmatmul.mubr.bf16.gmra.mrb[0].mxu0 %v125
  %v251 = vpop.f32.mrb[0].mxu0
  %v252 = vadd.f32 0.0, %v251
  %v253 = vpop.f32.mrb[0].mxu0
  %v254 = vpop.f32.mrb[0].mxu0
  %v255 = vadd.f32 0.0, %v254
  %v256 = vpop.f32.mrb[0].mxu0
  %257 = vmatprep.mubr.bf16.mxu0 0
  %258 = vmatmul.mubr.bf16.gmra.mrb[0].mxu0 %v126
  %v259 = vpop.f32.mrb[0].mxu0
  %v260 = vadd.f32 0.0, %v259
  %v261 = vpop.f32.mrb[0].mxu0
  %v262 = vpop.f32.mrb[0].mxu0
  %v263 = vadd.f32 0.0, %v262
  %v264 = vpop.f32.mrb[0].mxu0
  %265 = vmatprep.mubr.bf16.mxu0 0
  %266 = vmatmul.mubr.bf16.gmra.mrb[0].mxu0 %v127
  %v267 = vpop.f32.mrb[0].mxu0
  %v268 = vadd.f32 0.0, %v267
  %v269 = vpop.f32.mrb[0].mxu0
  %v270 = vpop.f32.mrb[0].mxu0
  %v271 = vadd.f32 0.0, %v270
  %v272 = vpop.f32.mrb[0].mxu0
  %273 = vmatprep.mubr.bf16.mxu0 0
  %274 = vmatmul.mubr.bf16.gmra.mrb[0].mxu0 %v128
  %v275 = vpop.f32.mrb[0].mxu0
  %v276 = vadd.f32 0.0, %v275
  %v277 = vpop.f32.mrb[0].mxu0
  %v278 = vpop.f32.mrb[0].mxu0
  %v279 = vadd.f32 0.0, %v278
  %v280 = vpop.f32.mrb[0].mxu0
  %281 = vdwg.mxu0
  %v282 = vadd.f32 %v41, %v220
  %v283 = vadd.f32 %v42, %v223
  %v284 = vadd.f32 %v43, %v228
  %v285 = vadd.f32 %v44, %v231
  %v286 = vadd.f32 %v45, %v236
  %v287 = vadd.f32 %v46, %v239
  %v288 = vadd.f32 %v47, %v244
  %v289 = vadd.f32 %v48, %v247
  %v290 = vadd.f32 %v49, %v252
  %v291 = vadd.f32 %v50, %v255
  %v292 = vadd.f32 %v51, %v260
  %v293 = vadd.f32 %v52, %v263
  %v294 = vadd.f32 %v53, %v268
  %v295 = vadd.f32 %v54, %v271
  %v296 = vadd.f32 %v55, %v276
  %v297 = vadd.f32 %v56, %v279
  %298 = vst [vmem:[#allocation2] sm:$0xff] %v282
  %299 = vst [vmem:[#allocation2 + $0x8] sm:$0xff] %v283
  %300 = vst [vmem:[#allocation2 + $0x10] sm:$0xff] %v284
  %301 = vst [vmem:[#allocation2 + $0x18] sm:$0xff] %v285
  %302 = vst [vmem:[#allocation2 + $0x20] sm:$0xff] %v286
  %303 = vst [vmem:[#allocation2 + $0x28] sm:$0xff] %v287
  %304 = vst [vmem:[#allocation2 + $0x30] sm:$0xff] %v288
  %305 = vst [vmem:[#allocation2 + $0x38] sm:$0xff] %v289
  %306 = vst [vmem:[#allocation2 + $0x40] sm:$0xff] %v290
  %307 = vst [vmem:[#allocation2 + $0x48] sm:$0xff] %v291
  %308 = vst [vmem:[#allocation2 + $0x50] sm:$0xff] %v292
  %309 = vst [vmem:[#allocation2 + $0x58] sm:$0xff] %v293
  %310 = vst [vmem:[#allocation2 + $0x60] sm:$0xff] %v294
  %311 = vst [vmem:[#allocation2 + $0x68] sm:$0xff] %v295
  %312 = vst [vmem:[#allocation2 + $0x70] sm:$0xff] %v296
  %313 = vst [vmem:[#allocation2 + $0x78] sm:$0xff] %v297
  // Predicated region
  $region26: #{binlex_inner_gnn.3} parent=0 // pred_check
    %p314 = pneg %p21
  $region27: #{binlex_inner_gnn.3} parent=0 // pred_check_branch
    %316 = sbr.rel (%p314) target = $region29
  $region28: #{binlex_inner_gnn.3} parent=0 // pred_region
    %v317 = vld [vmem:[#allocation2] sm:$0xff]
    %v318 = vld [vmem:[#allocation2 + $0x8] sm:$0xff]
    %v319 = vld [vmem:[#allocation2 + $0x10] sm:$0xff]
    %v320 = vld [vmem:[#allocation2 + $0x18] sm:$0xff]
    %v321 = vld [vmem:[#allocation2 + $0x20] sm:$0xff]
    %v322 = vld [vmem:[#allocation2 + $0x28] sm:$0xff]
    %v323 = vld [vmem:[#allocation2 + $0x30] sm:$0xff]
    %v324 = vld [vmem:[#allocation2 + $0x38] sm:$0xff]
    %v325 = vld [vmem:[#allocation2 + $0x40] sm:$0xff]
    %v326 = vld [vmem:[#allocation2 + $0x48] sm:$0xff]
    %v327 = vld [vmem:[#allocation2 + $0x50] sm:$0xff]
    %v328 = vld [vmem:[#allocation2 + $0x58] sm:$0xff]
    %v329 = vld [vmem:[#allocation2 + $0x60] sm:$0xff]
    %v330 = vld [vmem:[#allocation2 + $0x68] sm:$0xff]
    %v331 = vld [vmem:[#allocation2 + $0x70] sm:$0xff]
    %v332 = vld [vmem:[#allocation2 + $0x78] sm:$0xff]
    %v333 = vld [vmem:[%s2] sm:$0xff]
    %v334 = vld [vmem:[%s2 + $0x8] sm:$0xff]
    %v335 = vld [vmem:[%s2 + $0x10] sm:$0xff]
    %v336 = vld [vmem:[%s2 + $0x18] sm:$0xff]
    %v337 = vld [vmem:[%s2 + $0x20] sm:$0xff]
    %v338 = vld [vmem:[%s2 + $0x28] sm:$0xff]
    %v339 = vld [vmem:[%s2 + $0x30] sm:$0xff]
    %v340 = vld [vmem:[%s2 + $0x38] sm:$0xff]
    %v341 = vld [vmem:[%s2 + $0x40] sm:$0xff]
    %v342 = vld [vmem:[%s2 + $0x48] sm:$0xff]
    %v343 = vld [vmem:[%s2 + $0x50] sm:$0xff]
    %v344 = vld [vmem:[%s2 + $0x58] sm:$0xff]
    %v345 = vld [vmem:[%s2 + $0x60] sm:$0xff]
    %v346 = vld [vmem:[%s2 + $0x68] sm:$0xff]
    %v347 = vld [vmem:[%s2 + $0x70] sm:$0xff]
    %v348 = vld [vmem:[%s2 + $0x78] sm:$0xff]
    %349 = vmatprep.subr.mxu0 0.0
    %350 = vmatpush1.msra.mxu0 %v333
    %351 = vmatprep.subr.mxu0 0.0
    %352 = vmatpush1.msra.mxu0 %v334
    %353 = vmatprep.subr.mxu0 0.0
    %354 = vmatpush1.msra.mxu0 %v335
    %355 = vmatprep.subr.mxu0 0.0
    %356 = vmatpush1.msra.mxu0 %v336
    %357 = vmatprep.subr.mxu0 0.0
    %358 = vmatpush1.msra.mxu0 %v337
    %359 = vmatprep.subr.mxu0 0.0
    %360 = vmatpush1.msra.mxu0 %v338
    %361 = vmatprep.subr.mxu0 0.0
    %362 = vmatpush1.msra.mxu0 %v339
    %363 = vmatprep.subr.mxu0 0.0
    %364 = vmatpush1.msra.mxu0 %v340
    %365 = vmatprep.subr.mxu0 0.0
    %366 = vmatpush1.msra.mxu0 %v341
    %367 = vmatprep.subr.mxu0 0.0
    %368 = vmatpush1.msra.mxu0 %v342
    %369 = vmatprep.subr.mxu0 0.0
    %370 = vmatpush1.msra.mxu0 %v343
    %371 = vmatprep.subr.mxu0 0.0
    %372 = vmatpush1.msra.mxu0 %v344
    %373 = vmatprep.subr.mxu0 0.0
    %374 = vmatpush1.msra.mxu0 %v345
    %375 = vmatprep.subr.mxu0 0.0
    %376 = vmatpush1.msra.mxu0 %v346
    %377 = vmatprep.subr.mxu0 0.0
    %378 = vmatpush1.msra.mxu0 %v347
    %379 = vmatprep.subr.mxu0 0.0
    %380 = vmatpush1.msra.mxu0 %v348
    %381 = vmatprep.subr.mxu0 0.0
    %382 = vmatpush1.msra.mxu0 0.0
    %383 = vmatprep.subr.mxu0 0.0
    %384 = vmatpush1.msra.mxu0 0.0
    %385 = vmatprep.subr.mxu0 0.0
    %386 = vmatpush1.msra.mxu0 0.0
    %387 = vmatprep.subr.mxu0 0.0
    %388 = vmatpush1.msra.mxu0 0.0
    %389 = vmatprep.subr.mxu0 0.0
    %390 = vmatpush1.msra.mxu0 0.0
    %391 = vmatprep.subr.mxu0 0.0
    %392 = vmatpush1.msra.mxu0 0.0
    %393 = vmatprep.subr.mxu0 0.0
    %394 = vmatpush1.msra.mxu0 0.0
    %395 = vmatprep.subr.mxu0 0.0
    %396 = vmatpush1.msra.mxu0 0.0
    %397 = vmatprep.subr.mxu0 0.0
    %398 = vmatpush1.msra.mxu0 0.0
    %399 = vmatprep.subr.mxu0 0.0
    %400 = vmatpush1.msra.mxu0 0.0
    %401 = vmatprep.subr.mxu0 0.0
    %402 = vmatpush1.msra.mxu0 0.0
    %403 = vmatprep.subr.mxu0 0.0
    %404 = vmatpush1.msra.mxu0 0.0
    %405 = vmatprep.subr.mxu0 0.0
    %406 = vmatpush1.msra.mxu0 0.0
    %407 = vmatprep.subr.mxu0 0.0
    %408 = vmatpush1.msra.mxu0 0.0
    %409 = vmatprep.subr.mxu0 0.0
    %410 = vmatpush1.msra.mxu0 0.0
    %411 = vmatprep.subr.mxu0 0.0
    %412 = vmatpush1.msra.mxu0 0.0
    %413 = vmatprep.mubr.f32.mxu0 0.0
    %414 = vmatmul.mubr.f32.gmra.mrb[0].mxu0 %v317
    %v415 = vpop.f32.mrb[0].mxu0
    %v416 = vadd.f32 0.0, %v415
    %v417 = vpop.f32.mrb[0].mxu0
    %418 = vmatprep.mubr.f32.mxu0 0.0
    %419 = vmatmul.mubr.f32.gmra.mrb[0].mxu0 %v318
    %v420 = vpop.f32.mrb[0].mxu0
    %v421 = vadd.f32 0.0, %v420
    %v422 = vpop.f32.mrb[0].mxu0
    %423 = vmatprep.mubr.f32.mxu0 0.0
    %424 = vmatmul.mubr.f32.gmra.mrb[0].mxu0 %v319
    %v425 = vpop.f32.mrb[0].mxu0
    %v426 = vadd.f32 0.0, %v425
    %v427 = vpop.f32.mrb[0].mxu0
    %428 = vmatprep.mubr.f32.mxu0 0.0
    %429 = vmatmul.mubr.f32.gmra.mrb[0].mxu0 %v320
    %v430 = vpop.f32.mrb[0].mxu0
    %v431 = vadd.f32 0.0, %v430
    %v432 = vpop.f32.mrb[0].mxu0
    %433 = vmatprep.mubr.f32.mxu0 0.0
    %434 = vmatmul.mubr.f32.gmra.mrb[0].mxu0 %v321
    %v435 = vpop.f32.mrb[0].mxu0
    %v436 = vadd.f32 0.0, %v435
    %v437 = vpop.f32.mrb[0].mxu0
    %438 = vmatprep.mubr.f32.mxu0 0.0
    %439 = vmatmul.mubr.f32.gmra.mrb[0].mxu0 %v322
    %v440 = vpop.f32.mrb[0].mxu0
    %v441 = vadd.f32 0.0, %v440
    %v442 = vpop.f32.mrb[0].mxu0
    %443 = vmatprep.mubr.f32.mxu0 0.0
    %444 = vmatmul.mubr.f32.gmra.mrb[0].mxu0 %v323
    %v445 = vpop.f32.mrb[0].mxu0
    %v446 = vadd.f32 0.0, %v445
    %v447 = vpop.f32.mrb[0].mxu0
    %448 = vmatprep.mubr.f32.mxu0 0.0
    %449 = vmatmul.mubr.f32.gmra.mrb[0].mxu0 %v324
    %v450 = vpop.f32.mrb[0].mxu0
    %v451 = vadd.f32 0.0, %v450
    %v452 = vpop.f32.mrb[0].mxu0
    %453 = vmatprep.mubr.f32.mxu0 0.0
    %454 = vmatmul.mubr.f32.gmra.mrb[0].mxu0 %v325
    %v455 = vpop.f32.mrb[0].mxu0
    %v456 = vadd.f32 0.0, %v455
    %v457 = vpop.f32.mrb[0].mxu0
    %458 = vmatprep.mubr.f32.mxu0 0.0
    %459 = vmatmul.mubr.f32.gmra.mrb[0].mxu0 %v326
    %v460 = vpop.f32.mrb[0].mxu0
    %v461 = vadd.f32 0.0, %v460
    %v462 = vpop.f32.mrb[0].mxu0
    %463 = vmatprep.mubr.f32.mxu0 0.0
    %464 = vmatmul.mubr.f32.gmra.mrb[0].mxu0 %v327
    %v465 = vpop.f32.mrb[0].mxu0
    %v466 = vadd.f32 0.0, %v465
    %v467 = vpop.f32.mrb[0].mxu0
    %468 = vmatprep.mubr.f32.mxu0 0.0
    %469 = vmatmul.mubr.f32.gmra.mrb[0].mxu0 %v328
    %v470 = vpop.f32.mrb[0].mxu0
    %v471 = vadd.f32 0.0, %v470
    %v472 = vpop.f32.mrb[0].mxu0
    %473 = vmatprep.mubr.f32.mxu0 0.0
    %474 = vmatmul.mubr.f32.gmra.mrb[0].mxu0 %v329
    %v475 = vpop.f32.mrb[0].mxu0
    %v476 = vadd.f32 0.0, %v475
    %v477 = vpop.f32.mrb[0].mxu0
    %478 = vmatprep.mubr.f32.mxu0 0.0
    %479 = vmatmul.mubr.f32.gmra.mrb[0].mxu0 %v330
    %v480 = vpop.f32.mrb[0].mxu0
    %v481 = vadd.f32 0.0, %v480
    %v482 = vpop.f32.mrb[0].mxu0
    %483 = vmatprep.mubr.f32.mxu0 0.0
    %484 = vmatmul.mubr.f32.gmra.mrb[0].mxu0 %v331
    %v485 = vpop.f32.mrb[0].mxu0
    %v486 = vadd.f32 0.0, %v485
    %v487 = vpop.f32.mrb[0].mxu0
    %488 = vmatprep.mubr.f32.mxu0 0.0
    %489 = vmatmul.mubr.f32.gmra.mrb[0].mxu0 %v332
    %v490 = vpop.f32.mrb[0].mxu0
    %v491 = vadd.f32 0.0, %v490
    %v492 = vpop.f32.mrb[0].mxu0
    %493 = vdwg.mxu0
    %v494 = vld [vmem:[%s3] sm:$0x1]
    %v496 = vlaneseq
    %v497 = vshrl.u32 %v496, 7
    %v498 = vsub.s32 0, %v497
    %v499 = vrot.slane %v494, %v498
    %v501 = vmul.f32 %v416, %v499
    %v502 = vmul.f32 %v421, %v499
    %v503 = vmul.f32 %v426, %v499
    %v504 = vmul.f32 %v431, %v499
    %v505 = vmul.f32 %v436, %v499
    %v506 = vmul.f32 %v441, %v499
    %v507 = vmul.f32 %v446, %v499
    %v508 = vmul.f32 %v451, %v499
    %v509 = vmul.f32 %v456, %v499
    %v510 = vmul.f32 %v461, %v499
    %v511 = vmul.f32 %v466, %v499
    %v512 = vmul.f32 %v471, %v499
    %v513 = vmul.f32 %v476, %v499
    %v514 = vmul.f32 %v481, %v499
    %v515 = vmul.f32 %v486, %v499
    %v516 = vmul.f32 %v491, %v499
    %v517 = vld [vmem:[%s4] sm:$0x1]
    %v519 = vlaneseq
    %v520 = vshrl.u32 %v519, 7
    %v521 = vsub.s32 0, %v520
    %v522 = vrot.slane %v517, %v521
    %v524 = vadd.f32 %v501, %v522
    %v525 = vadd.f32 %v502, %v522
    %v526 = vadd.f32 %v503, %v522
    %v527 = vadd.f32 %v504, %v522
    %v528 = vadd.f32 %v505, %v522
    %v529 = vadd.f32 %v506, %v522
    %v530 = vadd.f32 %v507, %v522
    %v531 = vadd.f32 %v508, %v522
    %v532 = vadd.f32 %v509, %v522
    %v533 = vadd.f32 %v510, %v522
    %v534 = vadd.f32 %v511, %v522
    %v535 = vadd.f32 %v512, %v522
    %v536 = vadd.f32 %v513, %v522
    %v537 = vadd.f32 %v514, %v522
    %v538 = vadd.f32 %v515, %v522
    %v539 = vadd.f32 %v516, %v522
    %540 = vst [vmem:[%s5] sm:$0xff] %v524
    %541 = vst [vmem:[%s5 + $0x8] sm:$0xff] %v525
    %542 = vst [vmem:[%s5 + $0x10] sm:$0xff] %v526
    %543 = vst [vmem:[%s5 + $0x18] sm:$0xff] %v527
    %544 = vst [vmem:[%s5 + $0x20] sm:$0xff] %v528
    %545 = vst [vmem:[%s5 + $0x28] sm:$0xff] %v529
    %546 = vst [vmem:[%s5 + $0x30] sm:$0xff] %v530
    %547 = vst [vmem:[%s5 + $0x38] sm:$0xff] %v531
    %548 = vst [vmem:[%s5 + $0x40] sm:$0xff] %v532
    %549 = vst [vmem:[%s5 + $0x48] sm:$0xff] %v533
    %550 = vst [vmem:[%s5 + $0x50] sm:$0xff] %v534
    %551 = vst [vmem:[%s5 + $0x58] sm:$0xff] %v535
    %552 = vst [vmem:[%s5 + $0x60] sm:$0xff] %v536
    %553 = vst [vmem:[%s5 + $0x68] sm:$0xff] %v537
    %554 = vst [vmem:[%s5 + $0x70] sm:$0xff] %v538
    %555 = vst [vmem:[%s5 + $0x78] sm:$0xff] %v539
  $region29: #{binlex_inner_gnn.3} parent=0 // pred_fallthru
    _
  // Predicated region
  $region30: #{binlex_inner_gnn.3} parent=0 // pred_check
    _
  $region31: #{binlex_inner_gnn.3} parent=0 // pred_check_branch
    %557 = sbr.rel (0) target = $region33
  $region32: #{binlex_inner_gnn.3} parent=0 // pred_region
    _
  $region33: #{binlex_inner_gnn.3} parent=0 // pred_fallthru
    _
  // Predicated region
  $region34: #{binlex_inner_gnn.3} parent=0 // pred_check
    _
  $region35: #{binlex_inner_gnn.3} parent=0 // pred_check_branch
    %559 = sbr.rel (0) target = $region37
  $region36: #{binlex_inner_gnn.3} parent=0 // pred_region
    _
  $region37: #{binlex_inner_gnn.3} parent=0 // pred_fallthru
    _

// kernel: binlex_inner_gnn.2
$region0: #{binlex_inner_gnn.2}
  #allocation0 [shape = 'u32[]', space=smem, size = 0x4, offset = 0x4, fixed_abs, tag = 'smem constant byte address 0x4 - core index']
  #allocation1 [shape = 'u32[144,128]{1,0:T(1,128)}', space=vmem, size = 0x12000, scoped, tag = 'internal scratch']
  #allocation2 [shape = 'f32[128,128]{1,0:T(8,128)}', space=vmem, size = 0x10000, scoped, tag = 'scratch operand']
  %s0 = inlined_call_operand.vmem [shape: bf16[128,128], index: 0, kind: input, shape index: {}]
  %s1 = inlined_call_operand.vmem [shape: bf16[128,128], index: 1, kind: input, shape index: {}]
  %s2 = inlined_call_operand.vmem [shape: f32[128,128], index: 2, kind: input, shape index: {}]
  %s3 = inlined_call_operand.vmem [shape: f32[1,128], index: 3, kind: input, shape index: {}]
  %s4 = inlined_call_operand.vmem [shape: f32[1,128], index: 4, kind: input, shape index: {}]
  %s5 = inlined_call_operand.vmem [shape: bf16[128,128], index: 5, kind: output, shape index: {}]
  %s6 = sld [smem:[#allocation0]]
  $region38: #{binlex_inner_gnn.2} parent=0
    _
  %s8 = ssub.s32 1, %s6
  %s9 = scalar_select 0, %s8, %s6
  // Predicated region
  $region2: #{binlex_inner_gnn.2} parent=0 // pred_check
    _
  $region3: #{binlex_inner_gnn.2} parent=0 // pred_check_branch
    %11 = sbr.rel (0) target = $region5
  $region4: #{binlex_inner_gnn.2} parent=0 // pred_region
    _
  $region5: #{binlex_inner_gnn.2} parent=0 // pred_fallthru
    _
  // Predicated region
  $region6: #{binlex_inner_gnn.2} parent=0 // pred_check
    _
  $region7: #{binlex_inner_gnn.2} parent=0 // pred_check_branch
    %13 = sbr.rel (0) target = $region9
  $region8: #{binlex_inner_gnn.2} parent=0 // pred_region
    _
  $region9: #{binlex_inner_gnn.2} parent=0 // pred_fallthru
    _
  // Predicated region
  $region10: #{binlex_inner_gnn.2} parent=0 // pred_check
    _
  $region11: #{binlex_inner_gnn.2} parent=0 // pred_check_branch
    %15 = sbr.rel (0) target = $region13
  $region12: #{binlex_inner_gnn.2} parent=0 // pred_region
    _
  $region13: #{binlex_inner_gnn.2} parent=0 // pred_fallthru
    _
  // Predicated region
  $region14: #{binlex_inner_gnn.2} parent=0 // pred_check
    _
  $region15: #{binlex_inner_gnn.2} parent=0 // pred_check_branch
    %17 = sbr.rel (0) target = $region17
  $region16: #{binlex_inner_gnn.2} parent=0 // pred_region
    _
  $region17: #{binlex_inner_gnn.2} parent=0 // pred_fallthru
    _
  // Predicated region
  $region18: #{binlex_inner_gnn.2} parent=0 // pred_check
    _
  $region19: #{binlex_inner_gnn.2} parent=0 // pred_check_branch
    %19 = sbr.rel (0) target = $region21
  $region20: #{binlex_inner_gnn.2} parent=0 // pred_region
    _
  $region21: #{binlex_inner_gnn.2} parent=0 // pred_fallthru
    _
  %p21 = scmp.eq.s32.totalorder 0, 0
  // Predicated region
  $region22: #{binlex_inner_gnn.2} parent=0 // pred_check
    %p22 = pneg %p21
  $region23: #{binlex_inner_gnn.2} parent=0 // pred_check_branch
    %24 = sbr.rel (%p22) target = $region25
  $region24: #{binlex_inner_gnn.2} parent=0 // pred_region
    %25 = vst [vmem:[#allocation2] sm:$0xff] 0.0
    %26 = vst [vmem:[#allocation2 + $0x8] sm:$0xff] 0.0
    %27 = vst [vmem:[#allocation2 + $0x10] sm:$0xff] 0.0
    %28 = vst [vmem:[#allocation2 + $0x18] sm:$0xff] 0.0
    %29 = vst [vmem:[#allocation2 + $0x20] sm:$0xff] 0.0
    %30 = vst [vmem:[#allocation2 + $0x28] sm:$0xff] 0.0
    %31 = vst [vmem:[#allocation2 + $0x30] sm:$0xff] 0.0
    %32 = vst [vmem:[#allocation2 + $0x38] sm:$0xff] 0.0
    %33 = vst [vmem:[#allocation2 + $0x40] sm:$0xff] 0.0
    %34 = vst [vmem:[#allocation2 + $0x48] sm:$0xff] 0.0
    %35 = vst [vmem:[#allocation2 + $0x50] sm:$0xff] 0.0
    %36 = vst [vmem:[#allocation2 + $0x58] sm:$0xff] 0.0
    %37 = vst [vmem:[#allocation2 + $0x60] sm:$0xff] 0.0
    %38 = vst [vmem:[#allocation2 + $0x68] sm:$0xff] 0.0
    %39 = vst [vmem:[#allocation2 + $0x70] sm:$0xff] 0.0
    %40 = vst [vmem:[#allocation2 + $0x78] sm:$0xff] 0.0
  $region25: #{binlex_inner_gnn.2} parent=0 // pred_fallthru
    _
  %v41 = vld [vmem:[#allocation2] sm:$0xff]
  %v42 = vld [vmem:[#allocation2 + $0x8] sm:$0xff]
  %v43 = vld [vmem:[#allocation2 + $0x10] sm:$0xff]
  %v44 = vld [vmem:[#allocation2 + $0x18] sm:$0xff]
  %v45 = vld [vmem:[#allocation2 + $0x20] sm:$0xff]
  %v46 = vld [vmem:[#allocation2 + $0x28] sm:$0xff]
  %v47 = vld [vmem:[#allocation2 + $0x30] sm:$0xff]
  %v48 = vld [vmem:[#allocation2 + $0x38] sm:$0xff]
  %v49 = vld [vmem:[#allocation2 + $0x40] sm:$0xff]
  %v50 = vld [vmem:[#allocation2 + $0x48] sm:$0xff]
  %v51 = vld [vmem:[#allocation2 + $0x50] sm:$0xff]
  %v52 = vld [vmem:[#allocation2 + $0x58] sm:$0xff]
  %v53 = vld [vmem:[#allocation2 + $0x60] sm:$0xff]
  %v54 = vld [vmem:[#allocation2 + $0x68] sm:$0xff]
  %v55 = vld [vmem:[#allocation2 + $0x70] sm:$0xff]
  %v56 = vld [vmem:[#allocation2 + $0x78] sm:$0xff]
  %v57 = vld [vmem:[%s0] sm:$0xf]
  %v58 = vld [vmem:[%s0 + $0x4] sm:$0xf]
  %v59 = vld [vmem:[%s0 + $0x8] sm:$0xf]
  %v60 = vld [vmem:[%s0 + $0xc] sm:$0xf]
  %v61 = vld [vmem:[%s0 + $0x10] sm:$0xf]
  %v62 = vld [vmem:[%s0 + $0x14] sm:$0xf]
  %v63 = vld [vmem:[%s0 + $0x18] sm:$0xf]
  %v64 = vld [vmem:[%s0 + $0x1c] sm:$0xf]
  %v65 = vld [vmem:[%s0 + $0x20] sm:$0xf]
  %v66 = vld [vmem:[%s0 + $0x24] sm:$0xf]
  %v67 = vld [vmem:[%s0 + $0x28] sm:$0xf]
  %v68 = vld [vmem:[%s0 + $0x2c] sm:$0xf]
  %v69 = vld [vmem:[%s0 + $0x30] sm:$0xf]
  %v70 = vld [vmem:[%s0 + $0x34] sm:$0xf]
  %v71 = vld [vmem:[%s0 + $0x38] sm:$0xf]
  %v72 = vld [vmem:[%s0 + $0x3c] sm:$0xf]
  %v73 = vld [vmem:[%s1] sm:$0xf]
  %v74 = vld [vmem:[%s1 + $0x4] sm:$0xf]
  %v75 = vld [vmem:[%s1 + $0x8] sm:$0xf]
  %v76 = vld [vmem:[%s1 + $0xc] sm:$0xf]
  %v77 = vld [vmem:[%s1 + $0x10] sm:$0xf]
  %v78 = vld [vmem:[%s1 + $0x14] sm:$0xf]
  %v79 = vld [vmem:[%s1 + $0x18] sm:$0xf]
  %v80 = vld [vmem:[%s1 + $0x1c] sm:$0xf]
  %v81 = vld [vmem:[%s1 + $0x20] sm:$0xf]
  %v82 = vld [vmem:[%s1 + $0x24] sm:$0xf]
  %v83 = vld [vmem:[%s1 + $0x28] sm:$0xf]
  %v84 = vld [vmem:[%s1 + $0x2c] sm:$0xf]
  %v85 = vld [vmem:[%s1 + $0x30] sm:$0xf]
  %v86 = vld [vmem:[%s1 + $0x34] sm:$0xf]
  %v87 = vld [vmem:[%s1 + $0x38] sm:$0xf]
  %v88 = vld [vmem:[%s1 + $0x3c] sm:$0xf]
  %v105 = vunpack.c.l.b16 %v57
  %v106 = vunpack.c.l.b16 %v58
  %v107 = vunpack.c.l.b16 %v59
  %v108 = vunpack.c.l.b16 %v60
  %v109 = vunpack.c.l.b16 %v61
  %v110 = vunpack.c.l.b16 %v62
  %v111 = vunpack.c.l.b16 %v63
  %v112 = vunpack.c.l.b16 %v64
  %v113 = vunpack.c.l.b16 %v65
  %v114 = vunpack.c.l.b16 %v66
  %v115 = vunpack.c.l.b16 %v67
  %v116 = vunpack.c.l.b16 %v68
  %v117 = vunpack.c.l.b16 %v69
  %v118 = vunpack.c.l.b16 %v70
  %v119 = vunpack.c.l.b16 %v71
  %v120 = vunpack.c.l.b16 %v72
  %v121 = vpack.c.b16 %v106, %v105
  %v122 = vpack.c.b16 %v108, %v107
  %v123 = vpack.c.b16 %v110, %v109
  %v124 = vpack.c.b16 %v112, %v111
  %v125 = vpack.c.b16 %v114, %v113
  %v126 = vpack.c.b16 %v116, %v115
  %v127 = vpack.c.b16 %v118, %v117
  %v128 = vpack.c.b16 %v120, %v119
  %v153 = vunpack.c.l.b16 %v73
  %v154 = vunpack.c.l.b16 %v74
  %v155 = vunpack.c.l.b16 %v75
  %v156 = vunpack.c.l.b16 %v76
  %v157 = vunpack.c.l.b16 %v77
  %v158 = vunpack.c.l.b16 %v78
  %v159 = vunpack.c.l.b16 %v79
  %v160 = vunpack.c.l.b16 %v80
  %v161 = vunpack.c.l.b16 %v81
  %v162 = vunpack.c.l.b16 %v82
  %v163 = vunpack.c.l.b16 %v83
  %v164 = vunpack.c.l.b16 %v84
  %v165 = vunpack.c.l.b16 %v85
  %v166 = vunpack.c.l.b16 %v86
  %v167 = vunpack.c.l.b16 %v87
  %v168 = vunpack.c.l.b16 %v88
  %v169 = vpack.c.b16 %v154, %v153
  %v170 = vpack.c.b16 %v156, %v155
  %v171 = vpack.c.b16 %v158, %v157
  %v172 = vpack.c.b16 %v160, %v159
  %v173 = vpack.c.b16 %v162, %v161
  %v174 = vpack.c.b16 %v164, %v163
  %v175 = vpack.c.b16 %v166, %v165
  %v176 = vpack.c.b16 %v168, %v167
  %185 = vmatprep.subr.bf16.mxu0 0
  %186 = vmatpush1.bf16.msra.mxu0 %v169
  %187 = vmatprep.subr.bf16.mxu0 0
  %188 = vmatpush1.bf16.msra.mxu0 %v170
  %189 = vmatprep.subr.bf16.mxu0 0
  %190 = vmatpush1.bf16.msra.mxu0 %v171
  %191 = vmatprep.subr.bf16.mxu0 0
  %192 = vmatpush1.bf16.msra.mxu0 %v172
  %193 = vmatprep.subr.bf16.mxu0 0
  %194 = vmatpush1.bf16.msra.mxu0 %v173
  %195 = vmatprep.subr.bf16.mxu0 0
  %196 = vmatpush1.bf16.msra.mxu0 %v174
  %197 = vmatprep.subr.bf16.mxu0 0
  %198 = vmatpush1.bf16.msra.mxu0 %v175
  %199 = vmatprep.subr.bf16.mxu0 0
  %200 = vmatpush1.bf16.msra.mxu0 %v176
  %201 = vmatprep.subr.bf16.mxu0 0
  %202 = vmatpush1.bf16.msra.mxu0 0
  %203 = vmatprep.subr.bf16.mxu0 0
  %204 = vmatpush1.bf16.msra.mxu0 0
  %205 = vmatprep.subr.bf16.mxu0 0
  %206 = vmatpush1.bf16.msra.mxu0 0
  %207 = vmatprep.subr.bf16.mxu0 0
  %208 = vmatpush1.bf16.msra.mxu0 0
  %209 = vmatprep.subr.bf16.mxu0 0
  %210 = vmatpush1.bf16.msra.mxu0 0
  %211 = vmatprep.subr.bf16.mxu0 0
  %212 = vmatpush1.bf16.msra.mxu0 0
  %213 = vmatprep.subr.bf16.mxu0 0
  %214 = vmatpush1.bf16.msra.mxu0 0
  %215 = vmatprep.subr.bf16.mxu0 0
  %216 = vmatpush1.bf16.msra.mxu0 0
  %217 = vmatprep.mubr.bf16.mxu0 0
  %218 = vmatmul.mubr.bf16.gmra.mrb[0].mxu0 %v121
  %v219 = vpop.f32.mrb[0].mxu0
  %v220 = vadd.f32 0.0, %v219
  %v221 = vpop.f32.mrb[0].mxu0
  %v222 = vpop.f32.mrb[0].mxu0
  %v223 = vadd.f32 0.0, %v222
  %v224 = vpop.f32.mrb[0].mxu0
  %225 = vmatprep.mubr.bf16.mxu0 0
  %226 = vmatmul.mubr.bf16.gmra.mrb[0].mxu0 %v122
  %v227 = vpop.f32.mrb[0].mxu0
  %v228 = vadd.f32 0.0, %v227
  %v229 = vpop.f32.mrb[0].mxu0
  %v230 = vpop.f32.mrb[0].mxu0
  %v231 = vadd.f32 0.0, %v230
  %v232 = vpop.f32.mrb[0].mxu0
  %233 = vmatprep.mubr.bf16.mxu0 0
  %234 = vmatmul.mubr.bf16.gmra.mrb[0].mxu0 %v123
  %v235 = vpop.f32.mrb[0].mxu0
  %v236 = vadd.f32 0.0, %v235
  %v237 = vpop.f32.mrb[0].mxu0
  %v238 = vpop.f32.mrb[0].mxu0
  %v239 = vadd.f32 0.0, %v238
  %v240 = vpop.f32.mrb[0].mxu0
  %241 = vmatprep.mubr.bf16.mxu0 0
  %242 = vmatmul.mubr.bf16.gmra.mrb[0].mxu0 %v124
  %v243 = vpop.f32.mrb[0].mxu0
  %v244 = vadd.f32 0.0, %v243
  %v245 = vpop.f32.mrb[0].mxu0
  %v246 = vpop.f32.mrb[0].mxu0
  %v247 = vadd.f32 0.0, %v246
  %v248 = vpop.f32.mrb[0].mxu0
  %249 = vmatprep.mubr.bf16.mxu0 0
  %250 = vmatmul.mubr.bf16.gmra.mrb[0].mxu0 %v125
  %v251 = vpop.f32.mrb[0].mxu0
  %v252 = vadd.f32 0.0, %v251
  %v253 = vpop.f32.mrb[0].mxu0
  %v254 = vpop.f32.mrb[0].mxu0
  %v255 = vadd.f32 0.0, %v254
  %v256 = vpop.f32.mrb[0].mxu0
  %257 = vmatprep.mubr.bf16.mxu0 0
  %258 = vmatmul.mubr.bf16.gmra.mrb[0].mxu0 %v126
  %v259 = vpop.f32.mrb[0].mxu0
  %v260 = vadd.f32 0.0, %v259
  %v261 = vpop.f32.mrb[0].mxu0
  %v262 = vpop.f32.mrb[0].mxu0
  %v263 = vadd.f32 0.0, %v262
  %v264 = vpop.f32.mrb[0].mxu0
  %265 = vmatprep.mubr.bf16.mxu0 0
  %266 = vmatmul.mubr.bf16.gmra.mrb[0].mxu0 %v127
  %v267 = vpop.f32.mrb[0].mxu0
  %v268 = vadd.f32 0.0, %v267
  %v269 = vpop.f32.mrb[0].mxu0
  %v270 = vpop.f32.mrb[0].mxu0
  %v271 = vadd.f32 0.0, %v270
  %v272 = vpop.f32.mrb[0].mxu0
  %273 = vmatprep.mubr.bf16.mxu0 0
  %274 = vmatmul.mubr.bf16.gmra.mrb[0].mxu0 %v128
  %v275 = vpop.f32.mrb[0].mxu0
  %v276 = vadd.f32 0.0, %v275
  %v277 = vpop.f32.mrb[0].mxu0
  %v278 = vpop.f32.mrb[0].mxu0
  %v279 = vadd.f32 0.0, %v278
  %v280 = vpop.f32.mrb[0].mxu0
  %281 = vdwg.mxu0
  %v282 = vadd.f32 %v41, %v220
  %v283 = vadd.f32 %v42, %v223
  %v284 = vadd.f32 %v43, %v228
  %v285 = vadd.f32 %v44, %v231
  %v286 = vadd.f32 %v45, %v236
  %v287 = vadd.f32 %v46, %v239
  %v288 = vadd.f32 %v47, %v244
  %v289 = vadd.f32 %v48, %v247
  %v290 = vadd.f32 %v49, %v252
  %v291 = vadd.f32 %v50, %v255
  %v292 = vadd.f32 %v51, %v260
  %v293 = vadd.f32 %v52, %v263
  %v294 = vadd.f32 %v53, %v268
  %v295 = vadd.f32 %v54, %v271
  %v296 = vadd.f32 %v55, %v276
  %v297 = vadd.f32 %v56, %v279
  %298 = vst [vmem:[#allocation2] sm:$0xff] %v282
  %299 = vst [vmem:[#allocation2 + $0x8] sm:$0xff] %v283
  %300 = vst [vmem:[#allocation2 + $0x10] sm:$0xff] %v284
  %301 = vst [vmem:[#allocation2 + $0x18] sm:$0xff] %v285
  %302 = vst [vmem:[#allocation2 + $0x20] sm:$0xff] %v286
  %303 = vst [vmem:[#allocation2 + $0x28] sm:$0xff] %v287
  %304 = vst [vmem:[#allocation2 + $0x30] sm:$0xff] %v288
  %305 = vst [vmem:[#allocation2 + $0x38] sm:$0xff] %v289
  %306 = vst [vmem:[#allocation2 + $0x40] sm:$0xff] %v290
  %307 = vst [vmem:[#allocation2 + $0x48] sm:$0xff] %v291
  %308 = vst [vmem:[#allocation2 + $0x50] sm:$0xff] %v292
  %309 = vst [vmem:[#allocation2 + $0x58] sm:$0xff] %v293
  %310 = vst [vmem:[#allocation2 + $0x60] sm:$0xff] %v294
  %311 = vst [vmem:[#allocation2 + $0x68] sm:$0xff] %v295
  %312 = vst [vmem:[#allocation2 + $0x70] sm:$0xff] %v296
  %313 = vst [vmem:[#allocation2 + $0x78] sm:$0xff] %v297
  // Predicated region
  $region26: #{binlex_inner_gnn.2} parent=0 // pred_check
    %p314 = pneg %p21
  $region27: #{binlex_inner_gnn.2} parent=0 // pred_check_branch
    %316 = sbr.rel (%p314) target = $region29
  $region28: #{binlex_inner_gnn.2} parent=0 // pred_region
    %v317 = vld [vmem:[#allocation2] sm:$0xff]
    %v318 = vld [vmem:[#allocation2 + $0x8] sm:$0xff]
    %v319 = vld [vmem:[#allocation2 + $0x10] sm:$0xff]
    %v320 = vld [vmem:[#allocation2 + $0x18] sm:$0xff]
    %v321 = vld [vmem:[#allocation2 + $0x20] sm:$0xff]
    %v322 = vld [vmem:[#allocation2 + $0x28] sm:$0xff]
    %v323 = vld [vmem:[#allocation2 + $0x30] sm:$0xff]
    %v324 = vld [vmem:[#allocation2 + $0x38] sm:$0xff]
    %v325 = vld [vmem:[#allocation2 + $0x40] sm:$0xff]
    %v326 = vld [vmem:[#allocation2 + $0x48] sm:$0xff]
    %v327 = vld [vmem:[#allocation2 + $0x50] sm:$0xff]
    %v328 = vld [vmem:[#allocation2 + $0x58] sm:$0xff]
    %v329 = vld [vmem:[#allocation2 + $0x60] sm:$0xff]
    %v330 = vld [vmem:[#allocation2 + $0x68] sm:$0xff]
    %v331 = vld [vmem:[#allocation2 + $0x70] sm:$0xff]
    %v332 = vld [vmem:[#allocation2 + $0x78] sm:$0xff]
    %v333 = vld [vmem:[%s2] sm:$0xff]
    %v334 = vld [vmem:[%s2 + $0x8] sm:$0xff]
    %v335 = vld [vmem:[%s2 + $0x10] sm:$0xff]
    %v336 = vld [vmem:[%s2 + $0x18] sm:$0xff]
    %v337 = vld [vmem:[%s2 + $0x20] sm:$0xff]
    %v338 = vld [vmem:[%s2 + $0x28] sm:$0xff]
    %v339 = vld [vmem:[%s2 + $0x30] sm:$0xff]
    %v340 = vld [vmem:[%s2 + $0x38] sm:$0xff]
    %v341 = vld [vmem:[%s2 + $0x40] sm:$0xff]
    %v342 = vld [vmem:[%s2 + $0x48] sm:$0xff]
    %v343 = vld [vmem:[%s2 + $0x50] sm:$0xff]
    %v344 = vld [vmem:[%s2 + $0x58] sm:$0xff]
    %v345 = vld [vmem:[%s2 + $0x60] sm:$0xff]
    %v346 = vld [vmem:[%s2 + $0x68] sm:$0xff]
    %v347 = vld [vmem:[%s2 + $0x70] sm:$0xff]
    %v348 = vld [vmem:[%s2 + $0x78] sm:$0xff]
    %349 = vmatprep.subr.mxu0 0.0
    %350 = vmatpush1.msra.mxu0 %v333
    %351 = vmatprep.subr.mxu0 0.0
    %352 = vmatpush1.msra.mxu0 %v334
    %353 = vmatprep.subr.mxu0 0.0
    %354 = vmatpush1.msra.mxu0 %v335
    %355 = vmatprep.subr.mxu0 0.0
    %356 = vmatpush1.msra.mxu0 %v336
    %357 = vmatprep.subr.mxu0 0.0
    %358 = vmatpush1.msra.mxu0 %v337
    %359 = vmatprep.subr.mxu0 0.0
    %360 = vmatpush1.msra.mxu0 %v338
    %361 = vmatprep.subr.mxu0 0.0
    %362 = vmatpush1.msra.mxu0 %v339
    %363 = vmatprep.subr.mxu0 0.0
    %364 = vmatpush1.msra.mxu0 %v340
    %365 = vmatprep.subr.mxu0 0.0
    %366 = vmatpush1.msra.mxu0 %v341
    %367 = vmatprep.subr.mxu0 0.0
    %368 = vmatpush1.msra.mxu0 %v342
    %369 = vmatprep.subr.mxu0 0.0
    %370 = vmatpush1.msra.mxu0 %v343
    %371 = vmatprep.subr.mxu0 0.0
    %372 = vmatpush1.msra.mxu0 %v344
    %373 = vmatprep.subr.mxu0 0.0
    %374 = vmatpush1.msra.mxu0 %v345
    %375 = vmatprep.subr.mxu0 0.0
    %376 = vmatpush1.msra.mxu0 %v346
    %377 = vmatprep.subr.mxu0 0.0
    %378 = vmatpush1.msra.mxu0 %v347
    %379 = vmatprep.subr.mxu0 0.0
    %380 = vmatpush1.msra.mxu0 %v348
    %381 = vmatprep.subr.mxu0 0.0
    %382 = vmatpush1.msra.mxu0 0.0
    %383 = vmatprep.subr.mxu0 0.0
    %384 = vmatpush1.msra.mxu0 0.0
    %385 = vmatprep.subr.mxu0 0.0
    %386 = vmatpush1.msra.mxu0 0.0
    %387 = vmatprep.subr.mxu0 0.0
    %388 = vmatpush1.msra.mxu0 0.0
    %389 = vmatprep.subr.mxu0 0.0
    %390 = vmatpush1.msra.mxu0 0.0
    %391 = vmatprep.subr.mxu0 0.0
    %392 = vmatpush1.msra.mxu0 0.0
    %393 = vmatprep.subr.mxu0 0.0
    %394 = vmatpush1.msra.mxu0 0.0
    %395 = vmatprep.subr.mxu0 0.0
    %396 = vmatpush1.msra.mxu0 0.0
    %397 = vmatprep.subr.mxu0 0.0
    %398 = vmatpush1.msra.mxu0 0.0
    %399 = vmatprep.subr.mxu0 0.0
    %400 = vmatpush1.msra.mxu0 0.0
    %401 = vmatprep.subr.mxu0 0.0
    %402 = vmatpush1.msra.mxu0 0.0
    %403 = vmatprep.subr.mxu0 0.0
    %404 = vmatpush1.msra.mxu0 0.0
    %405 = vmatprep.subr.mxu0 0.0
    %406 = vmatpush1.msra.mxu0 0.0
    %407 = vmatprep.subr.mxu0 0.0
    %408 = vmatpush1.msra.mxu0 0.0
    %409 = vmatprep.subr.mxu0 0.0
    %410 = vmatpush1.msra.mxu0 0.0
    %411 = vmatprep.subr.mxu0 0.0
    %412 = vmatpush1.msra.mxu0 0.0
    %413 = vmatprep.mubr.f32.mxu0 0.0
    %414 = vmatmul.mubr.f32.gmra.mrb[0].mxu0 %v317
    %v415 = vpop.f32.mrb[0].mxu0
    %v416 = vadd.f32 0.0, %v415
    %v417 = vpop.f32.mrb[0].mxu0
    %418 = vmatprep.mubr.f32.mxu0 0.0
    %419 = vmatmul.mubr.f32.gmra.mrb[0].mxu0 %v318
    %v420 = vpop.f32.mrb[0].mxu0
    %v421 = vadd.f32 0.0, %v420
    %v422 = vpop.f32.mrb[0].mxu0
    %423 = vmatprep.mubr.f32.mxu0 0.0
    %424 = vmatmul.mubr.f32.gmra.mrb[0].mxu0 %v319
    %v425 = vpop.f32.mrb[0].mxu0
    %v426 = vadd.f32 0.0, %v425
    %v427 = vpop.f32.mrb[0].mxu0
    %428 = vmatprep.mubr.f32.mxu0 0.0
    %429 = vmatmul.mubr.f32.gmra.mrb[0].mxu0 %v320
    %v430 = vpop.f32.mrb[0].mxu0
    %v431 = vadd.f32 0.0, %v430
    %v432 = vpop.f32.mrb[0].mxu0
    %433 = vmatprep.mubr.f32.mxu0 0.0
    %434 = vmatmul.mubr.f32.gmra.mrb[0].mxu0 %v321
    %v435 = vpop.f32.mrb[0].mxu0
    %v436 = vadd.f32 0.0, %v435
    %v437 = vpop.f32.mrb[0].mxu0
    %438 = vmatprep.mubr.f32.mxu0 0.0
    %439 = vmatmul.mubr.f32.gmra.mrb[0].mxu0 %v322
    %v440 = vpop.f32.mrb[0].mxu0
    %v441 = vadd.f32 0.0, %v440
    %v442 = vpop.f32.mrb[0].mxu0
    %443 = vmatprep.mubr.f32.mxu0 0.0
    %444 = vmatmul.mubr.f32.gmra.mrb[0].mxu0 %v323
    %v445 = vpop.f32.mrb[0].mxu0
    %v446 = vadd.f32 0.0, %v445
    %v447 = vpop.f32.mrb[0].mxu0
    %448 = vmatprep.mubr.f32.mxu0 0.0
    %449 = vmatmul.mubr.f32.gmra.mrb[0].mxu0 %v324
    %v450 = vpop.f32.mrb[0].mxu0
    %v451 = vadd.f32 0.0, %v450
    %v452 = vpop.f32.mrb[0].mxu0
    %453 = vmatprep.mubr.f32.mxu0 0.0
    %454 = vmatmul.mubr.f32.gmra.mrb[0].mxu0 %v325
    %v455 = vpop.f32.mrb[0].mxu0
    %v456 = vadd.f32 0.0, %v455
    %v457 = vpop.f32.mrb[0].mxu0
    %458 = vmatprep.mubr.f32.mxu0 0.0
    %459 = vmatmul.mubr.f32.gmra.mrb[0].mxu0 %v326
    %v460 = vpop.f32.mrb[0].mxu0
    %v461 = vadd.f32 0.0, %v460
    %v462 = vpop.f32.mrb[0].mxu0
    %463 = vmatprep.mubr.f32.mxu0 0.0
    %464 = vmatmul.mubr.f32.gmra.mrb[0].mxu0 %v327
    %v465 = vpop.f32.mrb[0].mxu0
    %v466 = vadd.f32 0.0, %v465
    %v467 = vpop.f32.mrb[0].mxu0
    %468 = vmatprep.mubr.f32.mxu0 0.0
    %469 = vmatmul.mubr.f32.gmra.mrb[0].mxu0 %v328
    %v470 = vpop.f32.mrb[0].mxu0
    %v471 = vadd.f32 0.0, %v470
    %v472 = vpop.f32.mrb[0].mxu0
    %473 = vmatprep.mubr.f32.mxu0 0.0
    %474 = vmatmul.mubr.f32.gmra.mrb[0].mxu0 %v329
    %v475 = vpop.f32.mrb[0].mxu0
    %v476 = vadd.f32 0.0, %v475
    %v477 = vpop.f32.mrb[0].mxu0
    %478 = vmatprep.mubr.f32.mxu0 0.0
    %479 = vmatmul.mubr.f32.gmra.mrb[0].mxu0 %v330
    %v480 = vpop.f32.mrb[0].mxu0
    %v481 = vadd.f32 0.0, %v480
    %v482 = vpop.f32.mrb[0].mxu0
    %483 = vmatprep.mubr.f32.mxu0 0.0
    %484 = vmatmul.mubr.f32.gmra.mrb[0].mxu0 %v331
    %v485 = vpop.f32.mrb[0].mxu0
    %v486 = vadd.f32 0.0, %v485
    %v487 = vpop.f32.mrb[0].mxu0
    %488 = vmatprep.mubr.f32.mxu0 0.0
    %489 = vmatmul.mubr.f32.gmra.mrb[0].mxu0 %v332
    %v490 = vpop.f32.mrb[0].mxu0
    %v491 = vadd.f32 0.0, %v490
    %v492 = vpop.f32.mrb[0].mxu0
    %493 = vdwg.mxu0
    %v494 = vld [vmem:[%s3] sm:$0x1]
    %v496 = vlaneseq
    %v497 = vshrl.u32 %v496, 7
    %v498 = vsub.s32 0, %v497
    %v499 = vrot.slane %v494, %v498
    %v501 = vmul.f32 %v416, %v499
    %v502 = vmul.f32 %v421, %v499
    %v503 = vmul.f32 %v426, %v499
    %v504 = vmul.f32 %v431, %v499
    %v505 = vmul.f32 %v436, %v499
    %v506 = vmul.f32 %v441, %v499
    %v507 = vmul.f32 %v446, %v499
    %v508 = vmul.f32 %v451, %v499
    %v509 = vmul.f32 %v456, %v499
    %v510 = vmul.f32 %v461, %v499
    %v511 = vmul.f32 %v466, %v499
    %v512 = vmul.f32 %v471, %v499
    %v513 = vmul.f32 %v476, %v499
    %v514 = vmul.f32 %v481, %v499
    %v515 = vmul.f32 %v486, %v499
    %v516 = vmul.f32 %v491, %v499
    %v517 = vld [vmem:[%s4] sm:$0x1]
    %v519 = vlaneseq
    %v520 = vshrl.u32 %v519, 7
    %v521 = vsub.s32 0, %v520
    %v522 = vrot.slane %v517, %v521
    %v524 = vadd.f32 %v501, %v522
    %v525 = vadd.f32 %v502, %v522
    %v526 = vadd.f32 %v503, %v522
    %v527 = vadd.f32 %v504, %v522
    %v528 = vadd.f32 %v505, %v522
    %v529 = vadd.f32 %v506, %v522
    %v530 = vadd.f32 %v507, %v522
    %v531 = vadd.f32 %v508, %v522
    %v532 = vadd.f32 %v509, %v522
    %v533 = vadd.f32 %v510, %v522
    %v534 = vadd.f32 %v511, %v522
    %v535 = vadd.f32 %v512, %v522
    %v536 = vadd.f32 %v513, %v522
    %v537 = vadd.f32 %v514, %v522
    %v538 = vadd.f32 %v515, %v522
    %v539 = vadd.f32 %v516, %v522
    %v540 = vmax.f32 %v524, 0.0
    %v541 = vmax.f32 %v525, 0.0
    %v542 = vmax.f32 %v526, 0.0
    %v543 = vmax.f32 %v527, 0.0
    %v544 = vmax.f32 %v528, 0.0
    %v545 = vmax.f32 %v529, 0.0
    %v546 = vmax.f32 %v530, 0.0
    %v547 = vmax.f32 %v531, 0.0
    %v548 = vmax.f32 %v532, 0.0
    %v549 = vmax.f32 %v533, 0.0
    %v550 = vmax.f32 %v534, 0.0
    %v551 = vmax.f32 %v535, 0.0
    %v552 = vmax.f32 %v536, 0.0
    %v553 = vmax.f32 %v537, 0.0
    %v554 = vmax.f32 %v538, 0.0
    %v555 = vmax.f32 %v539, 0.0
    %v556 = vpack.c.bf16 %v541, %v540
    %v557 = vpack.c.bf16 %v543, %v542
    %v558 = vpack.c.bf16 %v545, %v544
    %v559 = vpack.c.bf16 %v547, %v546
    %v560 = vpack.c.bf16 %v549, %v548
    %v561 = vpack.c.bf16 %v551, %v550
    %v562 = vpack.c.bf16 %v553, %v552
    %v563 = vpack.c.bf16 %v555, %v554
    %v572 = vunpack.c.l.b16 %v556
    %v573 = vunpack.c.h.b16 %v556
    %v574 = vunpack.c.l.b16 %v557
    %v575 = vunpack.c.h.b16 %v557
    %v576 = vunpack.c.l.b16 %v558
    %v577 = vunpack.c.h.b16 %v558
    %v578 = vunpack.c.l.b16 %v559
    %v579 = vunpack.c.h.b16 %v559
    %v580 = vunpack.c.l.b16 %v560
    %v581 = vunpack.c.h.b16 %v560
    %v582 = vunpack.c.l.b16 %v561
    %v583 = vunpack.c.h.b16 %v561
    %v584 = vunpack.c.l.b16 %v562
    %v585 = vunpack.c.h.b16 %v562
    %v586 = vunpack.c.l.b16 %v563
    %v587 = vunpack.c.h.b16 %v563
    %v588 = vpack.c.b16 %v572, %v572
    %v589 = vpack.c.b16 %v573, %v573
    %v590 = vpack.c.b16 %v574, %v574
    %v591 = vpack.c.b16 %v575, %v575
    %v592 = vpack.c.b16 %v576, %v576
    %v593 = vpack.c.b16 %v577, %v577
    %v594 = vpack.c.b16 %v578, %v578
    %v595 = vpack.c.b16 %v579, %v579
    %v596 = vpack.c.b16 %v580, %v580
    %v597 = vpack.c.b16 %v581, %v581
    %v598 = vpack.c.b16 %v582, %v582
    %v599 = vpack.c.b16 %v583, %v583
    %v600 = vpack.c.b16 %v584, %v584
    %v601 = vpack.c.b16 %v585, %v585
    %v602 = vpack.c.b16 %v586, %v586
    %v603 = vpack.c.b16 %v587, %v587
    %620 = vst [vmem:[%s5] sm:$0xf] %v588
    %621 = vst [vmem:[%s5 + $0x4] sm:$0xf] %v589
    %622 = vst [vmem:[%s5 + $0x8] sm:$0xf] %v590
    %623 = vst [vmem:[%s5 + $0xc] sm:$0xf] %v591
    %624 = vst [vmem:[%s5 + $0x10] sm:$0xf] %v592
    %625 = vst [vmem:[%s5 + $0x14] sm:$0xf] %v593
    %626 = vst [vmem:[%s5 + $0x18] sm:$0xf] %v594
    %627 = vst [vmem:[%s5 + $0x1c] sm:$0xf] %v595
    %628 = vst [vmem:[%s5 + $0x20] sm:$0xf] %v596
    %629 = vst [vmem:[%s5 + $0x24] sm:$0xf] %v597
    %630 = vst [vmem:[%s5 + $0x28] sm:$0xf] %v598
    %631 = vst [vmem:[%s5 + $0x2c] sm:$0xf] %v599
    %632 = vst [vmem:[%s5 + $0x30] sm:$0xf] %v600
    %633 = vst [vmem:[%s5 + $0x34] sm:$0xf] %v601
    %634 = vst [vmem:[%s5 + $0x38] sm:$0xf] %v602
    %635 = vst [vmem:[%s5 + $0x3c] sm:$0xf] %v603
  $region29: #{binlex_inner_gnn.2} parent=0 // pred_fallthru
    _
  // Predicated region
  $region30: #{binlex_inner_gnn.2} parent=0 // pred_check
    _
  $region31: #{binlex_inner_gnn.2} parent=0 // pred_check_branch
    %637 = sbr.rel (0) target = $region33
  $region32: #{binlex_inner_gnn.2} parent=0 // pred_region
    _
  $region33: #{binlex_inner_gnn.2} parent=0 // pred_fallthru
    _
  // Predicated region
  $region34: #{binlex_inner_gnn.2} parent=0 // pred_check
    _
  $region35: #{binlex_inner_gnn.2} parent=0 // pred_check_branch
    %639 = sbr.rel (0) target = $region37
  $region36: #{binlex_inner_gnn.2} parent=0 // pred_region
    _
  $region37: #{binlex_inner_gnn.2} parent=0 // pred_fallthru
    _

</llo_original>
